<compile_context>
chip_gen: v5e
topology: v5e:2x2
jax: 0.10.0
libtpu: 0.0.40
codegen_flags: <defaults>
</compile_context>

<pallas_src>
import functools

import jax
import jax.numpy as jnp
from jax.experimental import pallas as pl
from jax.experimental.pallas import tpu as pltpu


def _round_up(x, m):
    return (x + m - 1) // m * m


def _vmem_capacity_bytes():
    """Physical VMEM of the attached TPU; conservative fallback if unavailable."""
    try:
        return int(pltpu.get_tpu_info().vmem_capacity_bytes)
    except Exception:
        return 64 * 1024 * 1024          # v7x-sized fallback (safe on v5e/v6e too)


def _lstm_chunk_kernel(len_ref, x_ref, wih_ref, whh_ref, bias_ref, h_ref, c_ref,
                       *, t_chunk, hidden, unroll):
    """Grid = (batch_blocks, time_chunks). One grid step runs `t_chunk` LSTM steps.

    h_ref is the kernel *output* block (b_blk, Hp); its block index is constant
    along the time axis so it stays resident in VMEM and doubles as the hidden
    state accumulator (written back to HBM once per batch block).  c_ref is a
    persistent VMEM scratch holding the cell state.
    """
    c_idx = pl.program_id(1)

    @pl.when(c_idx == 0)
    def _init():
        h_ref[...] = jnp.zeros_like(h_ref)
        c_ref[...] = jnp.zeros_like(c_ref)

    lengths = len_ref[...]                    # (b_blk, 1) int32, resident
    w_ih = wih_ref[...]                       # (Ep, 4Hp), resident (f32 or bf16)
    w_hh = whh_ref[...]                       # (Hp, 4Hp), resident (f32 or bf16)
    bias = bias_ref[...]                      # (1, 4Hp) float32, resident
    t0 = c_idx * t_chunk

    def step(i, carry):
        h, c = carry                          # (b_blk, Hp) float32 each
        x_t = x_ref[i]                        # (b_blk, Ep) streamed chunk row
        # Fused input projection: x_t @ W_ih^T is independent of h, so under the
        # partial unroll it overlaps the previous step's activation math.
        gates = (jnp.dot(x_t, w_ih, preferred_element_type=jnp.float32)
                 + jnp.dot(h.astype(w_hh.dtype), w_hh,
                           preferred_element_type=jnp.float32)
                 + bias)                      # (b_blk, 4Hp) float32

        i_g = jax.nn.sigmoid(gates[:, 0 * hidden:1 * hidden])
        f_g = jax.nn.sigmoid(gates[:, 1 * hidden:2 * hidden])
        g_g = jnp.tanh(gates[:, 2 * hidden:3 * hidden])
        o_g = jax.nn.sigmoid(gates[:, 3 * hidden:4 * hidden])

        c_new = f_g * c + i_g * g_g
        h_new = o_g * jnp.tanh(c_new)

        # pack_padded_sequence semantics: freeze state once t >= lengths[b].
        valid = (t0 + i) < lengths            # (b_blk, 1) bool
        return jnp.where(valid, h_new, h), jnp.where(valid, c_new, c)

    h_fin, c_fin = jax.lax.fori_loop(
        0, t_chunk, step, (h_ref[...], c_ref[...]), unroll=unroll)
    h_ref[...] = h_fin
    c_ref[...] = c_fin


def rnn_lstm_forward(tokens, lengths, params, *, t_chunk=64, b_block=256,
                     compute_dtype=jnp.bfloat16):
    """tokens: (T, B) int32 (seq-major), lengths: (B,) int32 (pack_padded order).

    Returns (B,) float32 == Linear(h_n).squeeze() of the PyTorch module.
    compute_dtype controls the matmul operand / streamed-x dtype; gate math,
    accumulation and the h/c state are always float32.
    """
    emb, w_ih, w_hh, b_ih, b_hh, w_lin, b_lin = (
        params["embedding"], params["w_ih"], params["w_hh"],
        params["b_ih"], params["b_hh"], params["w_lin"], params["b_lin"])

    T, B = tokens.shape
    E = emb.shape[1]
    H = w_hh.shape[1]

    mm_dt = jnp.dtype(compute_dtype)
    isz = mm_dt.itemsize

    # ---- pad to hardware tiles ----
    Hp = _round_up(H, 128)                       # hidden -> lanes
    Ep = _round_up(E, 128)                       # embedding -> lanes (clean MXU K)
    sub = 16 if isz == 2 else 8                  # bf16 packs 16 rows / sublane tile
    Bp = _round_up(B, sub)

    # Aim for >= 2 batch blocks so v7x's second TensorCore gets work
    # (no effect on v5e/v6e, which have a single TC).
    b_blk = _round_up(
        min(b_block, max(sub, _round_up(pl.cdiv(Bp, 2), sub))), sub)
    Bp = _round_up(Bp, b_blk)

    # ---- per-gate zero padding keeps the padded hidden units exactly at 0 ----
    def pad_gates(w, cols, cols_to):                       # (4H, cols) -> (4Hp, cols_to)
        w = w.reshape(4, H, cols)
        w = jnp.pad(w, ((0, 0), (0, Hp - H), (0, cols_to - cols)))
        return w.reshape(4 * Hp, cols_to)

    w_ih_t = pad_gates(w_ih, E, Ep).T.astype(mm_dt)        # (Ep, 4Hp)  resident
    w_hh_t = pad_gates(w_hh, H, Hp).T.astype(mm_dt)        # (Hp, 4Hp)  resident
    bias_p = jnp.pad((b_ih + b_hh).reshape(4, H),
                     ((0, 0), (0, Hp - H))).reshape(1, 4 * Hp).astype(jnp.float32)

    # ---- generation-aware VMEM budget -> time-chunk depth + compiler limit ----
    vmem_cap = _vmem_capacity_bytes()
    vmem_limit = min(vmem_cap - 4 * 1024 * 1024, 127 * 1024 * 1024)
    budget = vmem_limit - 2 * 1024 * 1024            # internal-scratch headroom
    fixed = (2 * Ep * 4 * Hp * isz                   # W_ih^T (default double buffer)
             + 2 * Hp * 4 * Hp * isz                 # W_hh^T
             + 2 * 8 * 4 * Hp * 4                    # bias (sublane-padded)
             + 2 * b_blk * 128 * 4                   # lengths (lane-padded)
             + 2 * b_blk * Hp * 4                    # h_n output block
             + b_blk * Hp * 4)                       # c state scratch
    per_step = 2 * b_blk * Ep * isz                  # double-buffered x time chunk
    max_chunk = max(1, (budget - fixed) // per_step)
    t_chunk = int(max(1, min(t_chunk, T, max_chunk)))
    Tp = _round_up(T, t_chunk)

    if t_chunk % 4 == 0:
        unroll = 4
    elif t_chunk % 2 == 0:
        unroll = 2
    else:
        unroll = 1

    # ---- embedding gather (XLA) + padding of the streamed inputs ----
    x_emb = jnp.take(emb, tokens, axis=0)                  # (T, B, E) float32
    x_p = jnp.pad(x_emb, ((0, Tp - T), (0, Bp - B), (0, Ep - E))).astype(mm_dt)
    len_p = jnp.pad(lengths.astype(jnp.int32), (0, Bp - B)).reshape(Bp, 1)

    grid = (Bp // b_blk, Tp // t_chunk)
    kernel = functools.partial(_lstm_chunk_kernel,
                               t_chunk=t_chunk, hidden=Hp, unroll=unroll)

    h_n = pl.pallas_call(
        kernel,
        out_shape=jax.ShapeDtypeStruct((Bp, Hp), jnp.float32),
        grid_spec=pltpu.PrefetchScalarGridSpec(
            num_scalar_prefetch=0,
            grid=grid,
            in_specs=[
                pl.BlockSpec((b_blk, 1), lambda b, c: (b, 0)),         # lengths (resident)
                pl.BlockSpec((t_chunk, b_blk, Ep),
                             lambda b, c: (c, b, 0)),                  # embedded x chunk
                pl.BlockSpec((Ep, 4 * Hp), lambda b, c: (0, 0)),       # W_ih^T (resident)
                pl.BlockSpec((Hp, 4 * Hp), lambda b, c: (0, 0)),       # W_hh^T (resident)
                pl.BlockSpec((1, 4 * Hp), lambda b, c: (0, 0)),        # bias   (resident)
            ],
            out_specs=pl.BlockSpec((b_blk, Hp), lambda b, c: (b, 0)),  # h_n (lane-dense)
            scratch_shapes=[pltpu.VMEM((b_blk, Hp), jnp.float32)],     # c state
        ),
        compiler_params=pltpu.CompilerParams(
            # batch blocks are independent (megacore split on v7x); time is sequential
            dimension_semantics=("parallel", "arbitrary"),
            vmem_limit_bytes=int(vmem_limit)),
    )(len_p, x_p, w_ih_t, w_hh_t, bias_p)

    # ---- tiny linear head on h_n done by XLA (keeps the kernel store lane-dense) ----
    y = h_n[:B, :H] @ w_lin.T.astype(jnp.float32) + b_lin
    return y[:, 0]                                                 # squeeze -> (B,)


def _reference_forward(tokens, lengths, params):
    """Pure-JAX reference of the same semantics, for a correctness check."""
    emb, w_ih, w_hh, b_ih, b_hh, w_lin, b_lin = (
        params["embedding"], params["w_ih"], params["w_hh"],
        params["b_ih"], params["b_hh"], params["w_lin"], params["b_lin"])
    T, B = tokens.shape
    H = w_hh.shape[1]
    x = jnp.take(emb, tokens, axis=0).astype(jnp.float32)
    hi = jax.lax.Precision.HIGHEST

    def step(carry, inp):
        h, c = carry
        x_t, t = inp
        gates = (jnp.dot(x_t, w_ih.T, precision=hi)
                 + jnp.dot(h, w_hh.T, precision=hi) + (b_ih + b_hh))
        i = jax.nn.sigmoid(gates[:, 0 * H:1 * H])
        f = jax.nn.sigmoid(gates[:, 1 * H:2 * H])
        g = jnp.tanh(gates[:, 2 * H:3 * H])
        o = jax.nn.sigmoid(gates[:, 3 * H:4 * H])
        c_new = f * c + i * g
        h_new = o * jnp.tanh(c_new)
        m = (t < lengths)[:, None]
        return (jnp.where(m, h_new, h), jnp.where(m, c_new, c)), None

    (h, _), _ = jax.lax.scan(
        step, (jnp.zeros((B, H)), jnp.zeros((B, H))),
        (x, jnp.arange(T, dtype=jnp.int32)))
    return (jnp.dot(h, w_lin.T, precision=hi) + b_lin)[:, 0]


if __name__ == "__main__":
    # Small, deterministic problem: vocab=50, E=16, H=32, T=8, B=2.
    VOCAB, E, H, T, B = 50, 16, 32, 8, 2

    key = jax.random.PRNGKey(0)
    ks = jax.random.split(key, 8)
    bound = 1.0 / jnp.sqrt(H)
    params = {
        "embedding": jax.random.normal(ks[0], (VOCAB, E), jnp.float32),
        "w_ih": jax.random.uniform(ks[1], (4 * H, E), jnp.float32, -bound, bound),
        "w_hh": jax.random.uniform(ks[2], (4 * H, H), jnp.float32, -bound, bound),
        "b_ih": jax.random.uniform(ks[3], (4 * H,), jnp.float32, -bound, bound),
        "b_hh": jax.random.uniform(ks[4], (4 * H,), jnp.float32, -bound, bound),
        "w_lin": jax.random.uniform(ks[5], (1, H), jnp.float32, -bound, bound),
        "b_lin": jax.random.uniform(ks[6], (1,), jnp.float32, -bound, bound),
    }

    tokens = jax.random.randint(ks[7], (T, B), 0, VOCAB, dtype=jnp.int32)
    lengths = jnp.array([8, 5], dtype=jnp.int32)   # sorted descending (pack_padded_sequence)

    ref = jax.block_until_ready(_reference_forward(tokens, lengths, params))

    # f32-operand path with t_chunk=4 -> 2 time chunks: exercises the h/c state carry
    # across grid steps.  Tolerance allows for the MXU's default-precision matmul
    # passes inside the kernel vs. the HIGHEST-precision XLA reference.
    out_f32 = jax.block_until_ready(
        rnn_lstm_forward(tokens, lengths, params, t_chunk=4,
                         compute_dtype=jnp.float32))
    assert out_f32.shape == (B,), out_f32.shape
    assert jnp.allclose(out_f32, ref, atol=1e-2, rtol=1e-2), (out_f32, ref)

    # Default bf16-operand path (f32 gate math and state), looser tolerance.
    out_bf16 = jax.block_until_ready(
        rnn_lstm_forward(tokens, lengths, params, compute_dtype=jnp.bfloat16))
    assert out_bf16.shape == (B,), out_bf16.shape
    assert jnp.allclose(out_bf16, ref, atol=5e-2, rtol=5e-2), (out_bf16, ref)

    print("KERNEL_OK")
</pallas_src>

<mosaic_0001>
module attributes {stable_mosaic.version = 11 : i64} {
  func.func @_lstm_chunk_kernel(%arg0: i32, %arg1: i32, %arg2: memref<8x1xi32, #tpu.memory_space<vmem>>, %arg3: memref<4x8x128xf32, #tpu.memory_space<vmem>>, %arg4: memref<128x512xf32, #tpu.memory_space<vmem>>, %arg5: memref<128x512xf32, #tpu.memory_space<vmem>>, %arg6: memref<1x512xf32, #tpu.memory_space<vmem>>, %arg7: memref<8x128xf32, #tpu.memory_space<vmem>>, %arg8: memref<8x128xf32, #tpu.memory_space<vmem>>) attributes {dimension_semantics = [#tpu.dimension_semantics<parallel>, #tpu.dimension_semantics<arbitrary>], iteration_bounds = array<i64: 1, 2>, scalar_prefetch = 0 : i64, scratch_operands = 1 : i64, tpu.core_type = #tpu.core_type<tc>, window_params = [{transform_indices = @transform_0, window_bounds = array<i64: 8, 1>}, {transform_indices = @transform_1, window_bounds = array<i64: 4, 8, 128>}, {pipeline_mode = #tpu.pipeline_mode<synchronous>, transform_indices = @transform_2, window_bounds = array<i64: 128, 512>}, {pipeline_mode = #tpu.pipeline_mode<synchronous>, transform_indices = @transform_3, window_bounds = array<i64: 128, 512>}, {pipeline_mode = #tpu.pipeline_mode<synchronous>, transform_indices = @transform_4, window_bounds = array<i64: 1, 512>}, {transform_indices = @transform_5, window_bounds = array<i64: 8, 128>}]} {
    %c0_i32 = arith.constant 0 : i32
    %0 = arith.cmpi eq, %arg1, %c0_i32 : i32
    %1 = arith.extui %0 : i1 to i32
    %c0_i32_0 = arith.constant 0 : i32
    %2 = arith.cmpi ne, %1, %c0_i32_0 : i32
    scf.if %2 {
      %cst_45 = arith.constant 0.000000e+00 : f32
      %180 = vector.broadcast %cst_45 : f32 to vector<8x128xf32>
      %c0_46 = arith.constant 0 : index
      %c0_47 = arith.constant 0 : index
      %181 = vector.load %arg7[%c0_46, %c0_47] : memref<8x128xf32, #tpu.memory_space<vmem>>, vector<8x128xf32>
      tpu.vector_store %arg7[%c0_46, %c0_47], %180 {strides = array<i32>} : memref<8x128xf32, #tpu.memory_space<vmem>>, vector<8x128xf32>,
      %cst_48 = arith.constant 0.000000e+00 : f32
      %182 = vector.broadcast %cst_48 : f32 to vector<8x128xf32>
      %c0_49 = arith.constant 0 : index
      %c0_50 = arith.constant 0 : index
      %183 = vector.load %arg8[%c0_49, %c0_50] : memref<8x128xf32, #tpu.memory_space<vmem>>, vector<8x128xf32>
      tpu.vector_store %arg8[%c0_49, %c0_50], %182 {strides = array<i32>} : memref<8x128xf32, #tpu.memory_space<vmem>>, vector<8x128xf32>,
    } else {
    }
    %c0 = arith.constant 0 : index
    %c0_1 = arith.constant 0 : index
    %3 = vector.load %arg2[%c0, %c0_1] : memref<8x1xi32, #tpu.memory_space<vmem>>, vector<8x1xi32>
    %c0_2 = arith.constant 0 : index
    %c0_3 = arith.constant 0 : index
    %4 = vector.load %arg4[%c0_2, %c0_3] : memref<128x512xf32, #tpu.memory_space<vmem>>, vector<128x512xf32>
    %c0_4 = arith.constant 0 : index
    %c0_5 = arith.constant 0 : index
    %5 = vector.load %arg5[%c0_4, %c0_5] : memref<128x512xf32, #tpu.memory_space<vmem>>, vector<128x512xf32>
    %c0_6 = arith.constant 0 : index
    %c0_7 = arith.constant 0 : index
    %6 = vector.load %arg6[%c0_6, %c0_7] : memref<1x512xf32, #tpu.memory_space<vmem>>, vector<1x512xf32>
    %c4_i32 = arith.constant 4 : i32
    %7 = arith.muli %arg1, %c4_i32 : i32
    %c0_8 = arith.constant 0 : index
    %c0_9 = arith.constant 0 : index
    %8 = vector.load %arg7[%c0_8, %c0_9] : memref<8x128xf32, #tpu.memory_space<vmem>>, vector<8x128xf32>
    %c0_10 = arith.constant 0 : index
    %c0_11 = arith.constant 0 : index
    %9 = vector.load %arg8[%c0_10, %c0_11] : memref<8x128xf32, #tpu.memory_space<vmem>>, vector<8x128xf32>
    %c0_i32_12 = arith.constant 0 : i32
    %10 = arith.index_cast %c0_i32_12 : i32 to index
    %c0_13 = arith.constant 0 : index
    %c0_14 = arith.constant 0 : index
    %11 = vector.load %arg3[%10, %c0_13, %c0_14] : memref<4x8x128xf32, #tpu.memory_space<vmem>>, vector<1x8x128xf32>
    %12 = vector.shape_cast %11 : vector<1x8x128xf32> to vector<8x128xf32>
    %cst = arith.constant dense<0.000000e+00> : vector<8x512xf32>
    %13 = tpu.matmul %12, %4, %cst {dimension_numbers = #tpu.dot_dimension_numbers<[1], [0], [0], [1], [0, 0, 1, 1], [], []>} : vector<8x128xf32>, vector<128x512xf32>, vector<8x512xf32> -> vector<8x512xf32>
    %cst_15 = arith.constant dense<0.000000e+00> : vector<8x512xf32>
    %14 = tpu.matmul %8, %5, %cst_15 {dimension_numbers = #tpu.dot_dimension_numbers<[1], [0], [0], [1], [0, 0, 1, 1], [], []>} : vector<8x128xf32>, vector<128x512xf32>, vector<8x512xf32> -> vector<8x512xf32>
    %15 = arith.addf %13, %14 : vector<8x512xf32>
    %16 = vector.broadcast %6 : vector<1x512xf32> to vector<8x512xf32>
    %17 = arith.addf %15, %16 : vector<8x512xf32>
    %18 = vector.extract_strided_slice %17 {offsets = [0, 0], sizes = [8, 128], strides = [1, 1]} : vector<8x512xf32> to vector<8x128xf32>
    %19 = arith.negf %18 : vector<8x128xf32>
    %20 = math.exp %19 : vector<8x128xf32>
    %cst_16 = arith.constant 1.000000e+00 : f32
    %21 = vector.broadcast %cst_16 : f32 to vector<8x128xf32>
    %22 = arith.addf %21, %20 : vector<8x128xf32>
    %23 = arith.divf %21, %22 : vector<8x128xf32>
    %24 = vector.extract_strided_slice %17 {offsets = [0, 128], sizes = [8, 128], strides = [1, 1]} : vector<8x512xf32> to vector<8x128xf32>
    %25 = arith.negf %24 : vector<8x128xf32>
    %26 = math.exp %25 : vector<8x128xf32>
    %cst_17 = arith.constant 1.000000e+00 : f32
    %27 = vector.broadcast %cst_17 : f32 to vector<8x128xf32>
    %28 = arith.addf %27, %26 : vector<8x128xf32>
    %29 = arith.divf %27, %28 : vector<8x128xf32>
    %30 = vector.extract_strided_slice %17 {offsets = [0, 256], sizes = [8, 128], strides = [1, 1]} : vector<8x512xf32> to vector<8x128xf32>
    %31 = math.tanh %30 : vector<8x128xf32>
    %32 = vector.extract_strided_slice %17 {offsets = [0, 384], sizes = [8, 128], strides = [1, 1]} : vector<8x512xf32> to vector<8x128xf32>
    %33 = arith.negf %32 : vector<8x128xf32>
    %34 = math.exp %33 : vector<8x128xf32>
    %cst_18 = arith.constant 1.000000e+00 : f32
    %35 = vector.broadcast %cst_18 : f32 to vector<8x128xf32>
    %36 = arith.addf %35, %34 : vector<8x128xf32>
    %37 = arith.divf %35, %36 : vector<8x128xf32>
    %38 = arith.mulf %29, %9 : vector<8x128xf32>
    %39 = arith.mulf %23, %31 : vector<8x128xf32>
    %40 = arith.addf %38, %39 : vector<8x128xf32>
    %41 = math.tanh %40 : vector<8x128xf32>
    %42 = arith.mulf %37, %41 : vector<8x128xf32>
    %43 = arith.addi %7, %c0_i32_12 : i32
    %44 = vector.broadcast %43 : i32 to vector<8x1xi32>
    %45 = arith.cmpi slt, %44, %3 : vector<8x1xi32>
    %46 = vector.shape_cast %45 : vector<8x1xi1> to vector<8x1xi1>
    %47 = vector.broadcast %46 : vector<8x1xi1> to vector<8x128xi1>
    %48 = arith.select %47, %42, %8 : vector<8x128xi1>, vector<8x128xf32>
    %49 = vector.shape_cast %45 : vector<8x1xi1> to vector<8x1xi1>
    %50 = vector.broadcast %49 : vector<8x1xi1> to vector<8x128xi1>
    %51 = arith.select %50, %40, %9 : vector<8x128xi1>, vector<8x128xf32>
    %c1_i32 = arith.constant 1 : i32
    %52 = arith.index_cast %c1_i32 : i32 to index
    %c0_19 = arith.constant 0 : index
    %c0_20 = arith.constant 0 : index
    %53 = vector.load %arg3[%52, %c0_19, %c0_20] : memref<4x8x128xf32, #tpu.memory_space<vmem>>, vector<1x8x128xf32>
    %54 = vector.shape_cast %53 : vector<1x8x128xf32> to vector<8x128xf32>
    %cst_21 = arith.constant dense<0.000000e+00> : vector<8x512xf32>
    %55 = tpu.matmul %54, %4, %cst_21 {dimension_numbers = #tpu.dot_dimension_numbers<[1], [0], [0], [1], [0, 0, 1, 1], [], []>} : vector<8x128xf32>, vector<128x512xf32>, vector<8x512xf32> -> vector<8x512xf32>
    %cst_22 = arith.constant dense<0.000000e+00> : vector<8x512xf32>
    %56 = tpu.matmul %48, %5, %cst_22 {dimension_numbers = #tpu.dot_dimension_numbers<[1], [0], [0], [1], [0, 0, 1, 1], [], []>} : vector<8x128xf32>, vector<128x512xf32>, vector<8x512xf32> -> vector<8x512xf32>
    %57 = arith.addf %55, %56 : vector<8x512xf32>
    %58 = vector.broadcast %6 : vector<1x512xf32> to vector<8x512xf32>
    %59 = arith.addf %57, %58 : vector<8x512xf32>
    %60 = vector.extract_strided_slice %59 {offsets = [0, 0], sizes = [8, 128], strides = [1, 1]} : vector<8x512xf32> to vector<8x128xf32>
    %61 = arith.negf %60 : vector<8x128xf32>
    %62 = math.exp %61 : vector<8x128xf32>
    %cst_23 = arith.constant 1.000000e+00 : f32
    %63 = vector.broadcast %cst_23 : f32 to vector<8x128xf32>
    %64 = arith.addf %63, %62 : vector<8x128xf32>
    %65 = arith.divf %63, %64 : vector<8x128xf32>
    %66 = vector.extract_strided_slice %59 {offsets = [0, 128], sizes = [8, 128], strides = [1, 1]} : vector<8x512xf32> to vector<8x128xf32>
    %67 = arith.negf %66 : vector<8x128xf32>
    %68 = math.exp %67 : vector<8x128xf32>
    %cst_24 = arith.constant 1.000000e+00 : f32
    %69 = vector.broadcast %cst_24 : f32 to vector<8x128xf32>
    %70 = arith.addf %69, %68 : vector<8x128xf32>
    %71 = arith.divf %69, %70 : vector<8x128xf32>
    %72 = vector.extract_strided_slice %59 {offsets = [0, 256], sizes = [8, 128], strides = [1, 1]} : vector<8x512xf32> to vector<8x128xf32>
    %73 = math.tanh %72 : vector<8x128xf32>
    %74 = vector.extract_strided_slice %59 {offsets = [0, 384], sizes = [8, 128], strides = [1, 1]} : vector<8x512xf32> to vector<8x128xf32>
    %75 = arith.negf %74 : vector<8x128xf32>
    %76 = math.exp %75 : vector<8x128xf32>
    %cst_25 = arith.constant 1.000000e+00 : f32
    %77 = vector.broadcast %cst_25 : f32 to vector<8x128xf32>
    %78 = arith.addf %77, %76 : vector<8x128xf32>
    %79 = arith.divf %77, %78 : vector<8x128xf32>
    %80 = arith.mulf %71, %51 : vector<8x128xf32>
    %81 = arith.mulf %65, %73 : vector<8x128xf32>
    %82 = arith.addf %80, %81 : vector<8x128xf32>
    %83 = math.tanh %82 : vector<8x128xf32>
    %84 = arith.mulf %79, %83 : vector<8x128xf32>
    %85 = arith.addi %7, %c1_i32 : i32
    %86 = vector.broadcast %85 : i32 to vector<8x1xi32>
    %87 = arith.cmpi slt, %86, %3 : vector<8x1xi32>
    %88 = vector.shape_cast %87 : vector<8x1xi1> to vector<8x1xi1>
    %89 = vector.broadcast %88 : vector<8x1xi1> to vector<8x128xi1>
    %90 = arith.select %89, %84, %48 : vector<8x128xi1>, vector<8x128xf32>
    %91 = vector.shape_cast %87 : vector<8x1xi1> to vector<8x1xi1>
    %92 = vector.broadcast %91 : vector<8x1xi1> to vector<8x128xi1>
    %93 = arith.select %92, %82, %51 : vector<8x128xi1>, vector<8x128xf32>
    %c2_i32 = arith.constant 2 : i32
    %94 = arith.index_cast %c2_i32 : i32 to index
    %c0_26 = arith.constant 0 : index
    %c0_27 = arith.constant 0 : index
    %95 = vector.load %arg3[%94, %c0_26, %c0_27] : memref<4x8x128xf32, #tpu.memory_space<vmem>>, vector<1x8x128xf32>
    %96 = vector.shape_cast %95 : vector<1x8x128xf32> to vector<8x128xf32>
    %cst_28 = arith.constant dense<0.000000e+00> : vector<8x512xf32>
    %97 = tpu.matmul %96, %4, %cst_28 {dimension_numbers = #tpu.dot_dimension_numbers<[1], [0], [0], [1], [0, 0, 1, 1], [], []>} : vector<8x128xf32>, vector<128x512xf32>, vector<8x512xf32> -> vector<8x512xf32>
    %cst_29 = arith.constant dense<0.000000e+00> : vector<8x512xf32>
    %98 = tpu.matmul %90, %5, %cst_29 {dimension_numbers = #tpu.dot_dimension_numbers<[1], [0], [0], [1], [0, 0, 1, 1], [], []>} : vector<8x128xf32>, vector<128x512xf32>, vector<8x512xf32> -> vector<8x512xf32>
    %99 = arith.addf %97, %98 : vector<8x512xf32>
    %100 = vector.broadcast %6 : vector<1x512xf32> to vector<8x512xf32>
    %101 = arith.addf %99, %100 : vector<8x512xf32>
    %102 = vector.extract_strided_slice %101 {offsets = [0, 0], sizes = [8, 128], strides = [1, 1]} : vector<8x512xf32> to vector<8x128xf32>
    %103 = arith.negf %102 : vector<8x128xf32>
    %104 = math.exp %103 : vector<8x128xf32>
    %cst_30 = arith.constant 1.000000e+00 : f32
    %105 = vector.broadcast %cst_30 : f32 to vector<8x128xf32>
    %106 = arith.addf %105, %104 : vector<8x128xf32>
    %107 = arith.divf %105, %106 : vector<8x128xf32>
    %108 = vector.extract_strided_slice %101 {offsets = [0, 128], sizes = [8, 128], strides = [1, 1]} : vector<8x512xf32> to vector<8x128xf32>
    %109 = arith.negf %108 : vector<8x128xf32>
    %110 = math.exp %109 : vector<8x128xf32>
    %cst_31 = arith.constant 1.000000e+00 : f32
    %111 = vector.broadcast %cst_31 : f32 to vector<8x128xf32>
    %112 = arith.addf %111, %110 : vector<8x128xf32>
    %113 = arith.divf %111, %112 : vector<8x128xf32>
    %114 = vector.extract_strided_slice %101 {offsets = [0, 256], sizes = [8, 128], strides = [1, 1]} : vector<8x512xf32> to vector<8x128xf32>
    %115 = math.tanh %114 : vector<8x128xf32>
    %116 = vector.extract_strided_slice %101 {offsets = [0, 384], sizes = [8, 128], strides = [1, 1]} : vector<8x512xf32> to vector<8x128xf32>
    %117 = arith.negf %116 : vector<8x128xf32>
    %118 = math.exp %117 : vector<8x128xf32>
    %cst_32 = arith.constant 1.000000e+00 : f32
    %119 = vector.broadcast %cst_32 : f32 to vector<8x128xf32>
    %120 = arith.addf %119, %118 : vector<8x128xf32>
    %121 = arith.divf %119, %120 : vector<8x128xf32>
    %122 = arith.mulf %113, %93 : vector<8x128xf32>
    %123 = arith.mulf %107, %115 : vector<8x128xf32>
    %124 = arith.addf %122, %123 : vector<8x128xf32>
    %125 = math.tanh %124 : vector<8x128xf32>
    %126 = arith.mulf %121, %125 : vector<8x128xf32>
    %127 = arith.addi %7, %c2_i32 : i32
    %128 = vector.broadcast %127 : i32 to vector<8x1xi32>
    %129 = arith.cmpi slt, %128, %3 : vector<8x1xi32>
    %130 = vector.shape_cast %129 : vector<8x1xi1> to vector<8x1xi1>
    %131 = vector.broadcast %130 : vector<8x1xi1> to vector<8x128xi1>
    %132 = arith.select %131, %126, %90 : vector<8x128xi1>, vector<8x128xf32>
    %133 = vector.shape_cast %129 : vector<8x1xi1> to vector<8x1xi1>
    %134 = vector.broadcast %133 : vector<8x1xi1> to vector<8x128xi1>
    %135 = arith.select %134, %124, %93 : vector<8x128xi1>, vector<8x128xf32>
    %c3_i32 = arith.constant 3 : i32
    %136 = arith.index_cast %c3_i32 : i32 to index
    %c0_33 = arith.constant 0 : index
    %c0_34 = arith.constant 0 : index
    %137 = vector.load %arg3[%136, %c0_33, %c0_34] : memref<4x8x128xf32, #tpu.memory_space<vmem>>, vector<1x8x128xf32>
    %138 = vector.shape_cast %137 : vector<1x8x128xf32> to vector<8x128xf32>
    %cst_35 = arith.constant dense<0.000000e+00> : vector<8x512xf32>
    %139 = tpu.matmul %138, %4, %cst_35 {dimension_numbers = #tpu.dot_dimension_numbers<[1], [0], [0], [1], [0, 0, 1, 1], [], []>} : vector<8x128xf32>, vector<128x512xf32>, vector<8x512xf32> -> vector<8x512xf32>
    %cst_36 = arith.constant dense<0.000000e+00> : vector<8x512xf32>
    %140 = tpu.matmul %132, %5, %cst_36 {dimension_numbers = #tpu.dot_dimension_numbers<[1], [0], [0], [1], [0, 0, 1, 1], [], []>} : vector<8x128xf32>, vector<128x512xf32>, vector<8x512xf32> -> vector<8x512xf32>
    %141 = arith.addf %139, %140 : vector<8x512xf32>
    %142 = vector.broadcast %6 : vector<1x512xf32> to vector<8x512xf32>
    %143 = arith.addf %141, %142 : vector<8x512xf32>
    %144 = vector.extract_strided_slice %143 {offsets = [0, 0], sizes = [8, 128], strides = [1, 1]} : vector<8x512xf32> to vector<8x128xf32>
    %145 = arith.negf %144 : vector<8x128xf32>
    %146 = math.exp %145 : vector<8x128xf32>
    %cst_37 = arith.constant 1.000000e+00 : f32
    %147 = vector.broadcast %cst_37 : f32 to vector<8x128xf32>
    %148 = arith.addf %147, %146 : vector<8x128xf32>
    %149 = arith.divf %147, %148 : vector<8x128xf32>
    %150 = vector.extract_strided_slice %143 {offsets = [0, 128], sizes = [8, 128], strides = [1, 1]} : vector<8x512xf32> to vector<8x128xf32>
    %151 = arith.negf %150 : vector<8x128xf32>
    %152 = math.exp %151 : vector<8x128xf32>
    %cst_38 = arith.constant 1.000000e+00 : f32
    %153 = vector.broadcast %cst_38 : f32 to vector<8x128xf32>
    %154 = arith.addf %153, %152 : vector<8x128xf32>
    %155 = arith.divf %153, %154 : vector<8x128xf32>
    %156 = vector.extract_strided_slice %143 {offsets = [0, 256], sizes = [8, 128], strides = [1, 1]} : vector<8x512xf32> to vector<8x128xf32>
    %157 = math.tanh %156 : vector<8x128xf32>
    %158 = vector.extract_strided_slice %143 {offsets = [0, 384], sizes = [8, 128], strides = [1, 1]} : vector<8x512xf32> to vector<8x128xf32>
    %159 = arith.negf %158 : vector<8x128xf32>
    %160 = math.exp %159 : vector<8x128xf32>
    %cst_39 = arith.constant 1.000000e+00 : f32
    %161 = vector.broadcast %cst_39 : f32 to vector<8x128xf32>
    %162 = arith.addf %161, %160 : vector<8x128xf32>
    %163 = arith.divf %161, %162 : vector<8x128xf32>
    %164 = arith.mulf %155, %135 : vector<8x128xf32>
    %165 = arith.mulf %149, %157 : vector<8x128xf32>
    %166 = arith.addf %164, %165 : vector<8x128xf32>
    %167 = math.tanh %166 : vector<8x128xf32>
    %168 = arith.mulf %163, %167 : vector<8x128xf32>
    %169 = arith.addi %7, %c3_i32 : i32
    %170 = vector.broadcast %169 : i32 to vector<8x1xi32>
    %171 = arith.cmpi slt, %170, %3 : vector<8x1xi32>
    %172 = vector.shape_cast %171 : vector<8x1xi1> to vector<8x1xi1>
    %173 = vector.broadcast %172 : vector<8x1xi1> to vector<8x128xi1>
    %174 = arith.select %173, %168, %132 : vector<8x128xi1>, vector<8x128xf32>
    %175 = vector.shape_cast %171 : vector<8x1xi1> to vector<8x1xi1>
    %176 = vector.broadcast %175 : vector<8x1xi1> to vector<8x128xi1>
    %177 = arith.select %176, %166, %135 : vector<8x128xi1>, vector<8x128xf32>
    %c4_i32_40 = arith.constant 4 : i32
    %c0_41 = arith.constant 0 : index
    %c0_42 = arith.constant 0 : index
    %178 = vector.load %arg7[%c0_41, %c0_42] : memref<8x128xf32, #tpu.memory_space<vmem>>, vector<8x128xf32>
    tpu.vector_store %arg7[%c0_41, %c0_42], %174 {strides = array<i32>} : memref<8x128xf32, #tpu.memory_space<vmem>>, vector<8x128xf32>,
    %c0_43 = arith.constant 0 : index
    %c0_44 = arith.constant 0 : index
    %179 = vector.load %arg8[%c0_43, %c0_44] : memref<8x128xf32, #tpu.memory_space<vmem>>, vector<8x128xf32>
    tpu.vector_store %arg8[%c0_43, %c0_44], %177 {strides = array<i32>} : memref<8x128xf32, #tpu.memory_space<vmem>>, vector<8x128xf32>,
    return
  }
  func.func @transform_0(%arg0: i32, %arg1: i32) -> (i32, i32) {
    %c0_i32 = arith.constant 0 : i32
    %c0_i32_0 = arith.constant 0 : i32
    return %arg0, %c0_i32 : i32, i32
  }
  func.func @transform_1(%arg0: i32, %arg1: i32) -> (i32, i32, i32) {
    %c0_i32 = arith.constant 0 : i32
    %c0_i32_0 = arith.constant 0 : i32
    return %arg1, %arg0, %c0_i32 : i32, i32, i32
  }
  func.func @transform_2(%arg0: i32, %arg1: i32) -> (i32, i32) {
    %c0_i32 = arith.constant 0 : i32
    %c0_i32_0 = arith.constant 0 : i32
    %c0_i32_1 = arith.constant 0 : i32
    return %c0_i32, %c0_i32_0 : i32, i32
  }
  func.func @transform_3(%arg0: i32, %arg1: i32) -> (i32, i32) {
    %c0_i32 = arith.constant 0 : i32
    %c0_i32_0 = arith.constant 0 : i32
    %c0_i32_1 = arith.constant 0 : i32
    return %c0_i32, %c0_i32_0 : i32, i32
  }
  func.func @transform_4(%arg0: i32, %arg1: i32) -> (i32, i32) {
    %c0_i32 = arith.constant 0 : i32
    %c0_i32_0 = arith.constant 0 : i32
    %c0_i32_1 = arith.constant 0 : i32
    return %c0_i32, %c0_i32_0 : i32, i32
  }
  func.func @transform_5(%arg0: i32, %arg1: i32) -> (i32, i32) {
    %c0_i32 = arith.constant 0 : i32
    %c0_i32_0 = arith.constant 0 : i32
    return %arg0, %c0_i32 : i32, i32
  }
}

</mosaic_0001>

<llo_original>
// kernel: tpu_custom_call.1
$region0: #{tpu_custom_call.1}
  #allocation0 [shape = 'u32[]', space=smem, size = 0x4, offset = 0x4, fixed_abs, tag = 'smem constant byte address 0x4 - core index']
  #allocation1 [shape = 'u32[72,128]{1,0:T(1,128)}', space=vmem, size = 0x9000, scoped, tag = 'internal scratch']
  #allocation2 [shape = 'f32[8,128]{1,0:T(8,128)}', space=vmem, size = 0x1000, scoped, tag = 'scratch operand']
  %s0 = inlined_call_operand.vmem [shape: s32[8,1], index: 0, kind: input, shape index: {}]
  %s1 = inlined_call_operand.hbm [shape: f32[8,8,128], index: 1, kind: input, shape index: {}]
  %s2 = inlined_call_operand.hbm [shape: f32[128,512], index: 2, kind: input, shape index: {}]
  %s3 = inlined_call_operand.hbm [shape: f32[128,512], index: 3, kind: input, shape index: {}]
  %s4 = inlined_call_operand.vmem [shape: f32[1,512], index: 4, kind: input, shape index: {}]
  %s5 = inlined_call_operand.hbm [shape: f32[8,128], index: 5, kind: output, shape index: {}]
  %s6 = sld [smem:[#allocation0]]
  $region69: #{tpu_custom_call.1} parent=0
    _
  %s8 = ssub.s32 1, %s6
  %s9 = scalar_select 0, %s8, %s6
  $region1: #{tpu_custom_call.1} parent=0
    #allocation3 [shape = 'u8[32768]{0}', space=vmem, size = 0x8000, scoped, tag = 'input window, operand 1']
    #allocation4 [shape = 's32[2]{0}', space=sflag, size = 0x8, scoped, tag = 'scoped memory for tpu_custom_call.1']
    #allocation5 [shape = 's32[2]{0}', space=sflag, size = 0x8, scoped, tag = 'scoped memory for tpu_custom_call.1']
    #allocation6 [shape = 'u8[262144]{0}', space=vmem, size = 0x40000, scoped, tag = 'input window, operand 2, single buffered']
    #allocation7 [shape = 's32[1]{0}', space=sflag, size = 0x4, scoped, tag = 'scoped memory for tpu_custom_call.1']
    #allocation8 [shape = 'u8[262144]{0}', space=vmem, size = 0x40000, scoped, tag = 'input window, operand 3, single buffered']
    #allocation9 [shape = 'u8[4096]{0}', space=vmem, size = 0x1000, scoped, tag = 'output window, operand 0, single buffered']
    %10 = vsyncpa [#allocation4], 0
    %s11 = scalar_lea.sflag [#allocation4], 1
    %12 = vsyncpa %s11, 0
    %13 = vsyncpa [#allocation7], 0
    %14 = vsyncpa [#allocation5], 0
    loop: start=0, step=1, limit=4
    $region2: #{tpu_custom_call.1} parent=1 // loop_pre_header
      _
    $region3: #{tpu_custom_call.1} parent=1 // loop_header
      %s16 = sphi 0, %s20
      %p17 = scmp.ge.s32.totalorder %s16, 4
      %s23 = sphi 0, %s35
      %s24 = sphi 0, %s31
      %s25 = sphi 0, %s23
      %s26 = sphi 0, %s24
      %s27 = sphi 0, %s25
      %s28 = sphi 0, %s26
      %s38 = sphi 0, %s40
      %s41 = sphi 0, %s38
      %s42 = sphi 0, %s41
      %s58 = sphi 0, %s42
      %s66 = sphi 0, %s68
      %s69 = sphi 0, %s66
      %s70 = sphi 0, %s69
      %s86 = sphi 0, %s70
      %s90 = sphi 0, %s90
      %s92 = sphi 0, %s90
      %s93 = sphi 0, %s92
      %s107 = sphi 0, %s93
      %s111 = sphi 0, %s111
      %s113 = sphi 0, %s111
      %s114 = sphi 0, %s113
      %s128 = sphi 0, %s114
      %s132 = sphi 0, %s132
      %s134 = sphi 0, %s132
      %s135 = sphi 0, %s134
      %s149 = sphi 0, %s135
      %s155 = sphi 0, %s157
      %s158 = sphi 0, %s155
      %s159 = sphi 0, %s158
      %s175 = sphi 0, %s159
    $region4: #{tpu_custom_call.1} parent=1 // loop_header_branch
      %19 = sbr.rel (%p17) target = $region8
    $region5: #{tpu_custom_call.1} parent=1 // loop_body
      %s21 = ssub.s32 %s16, 1
      %s22 = ssub.s32 %s16, 2
      %s29 = sadd.s32 1, %s24
      %p30 = scmp.ge.s32.totalorder %s29, 2
      %s31 = scalar_select %p30, 0, %s29
      %s32 = sadd.s32 1, %s23
      %s33 = scalar_select %p30, %s32, %s23
      %p34 = scmp.ge.s32.totalorder %s33, 1
      %s35 = scalar_select %p34, 0, %s33
      %s36 = ssub.s32 %s23, %s35
      %p37 = scmp.eq.s32.totalorder %s36, 0
      %s39 = sadd.s32 %s38, 1
      %s40 = scalar_select %p37, %s38, %s39
      %p43 = pneg %p37
      %p44 = scmp.eq.s32.totalorder %s16, 1
      %p45 = por %p43, %p44
      %p46 = scmp.ne.s32.totalorder %s38, %s41
      %p47 = scmp.eq.s32.totalorder %s16, 0
      %p48 = por %p46, %p47
      %p49 = scmp.ne.s32.totalorder %s38, %s41
      %p50 = scmp.eq.s32.totalorder %s21, 1
      %p51 = por %p49, %p50
      %p52 = scmp.ne.s32.totalorder %s41, %s42
      %p53 = scmp.eq.s32.totalorder %s21, 0
      %p54 = por %p52, %p53
      %p55 = scmp.ne.s32.totalorder %s41, %s42
      %p56 = scmp.eq.s32.totalorder %s22, 1
      %p57 = por %p55, %p56
      %p59 = scmp.ne.s32.totalorder %s42, %s58
      %p60 = scmp.eq.s32.totalorder %s22, 0
      %p61 = por %p59, %p60
      %s62 = ssub.s32 %s24, %s31
      %s63 = ssub.s32 %s23, %s35
      %s64 = sor.u32 %s62, %s63
      %p65 = scmp.eq.s32.totalorder %s64, 0
      %s67 = sadd.s32 %s66, 1
      %s68 = scalar_select %p65, %s66, %s67
      %p71 = pneg %p65
      %p72 = scmp.eq.s32.totalorder %s16, 1
      %p73 = por %p71, %p72
      %p74 = scmp.ne.s32.totalorder %s66, %s69
      %p75 = scmp.eq.s32.totalorder %s16, 0
      %p76 = por %p74, %p75
      %p77 = scmp.ne.s32.totalorder %s66, %s69
      %p78 = scmp.eq.s32.totalorder %s21, 1
      %p79 = por %p77, %p78
      %p80 = scmp.ne.s32.totalorder %s69, %s70
      %p81 = scmp.eq.s32.totalorder %s21, 0
      %p82 = por %p80, %p81
      %p83 = scmp.ne.s32.totalorder %s69, %s70
      %p84 = scmp.eq.s32.totalorder %s22, 1
      %p85 = por %p83, %p84
      %p87 = scmp.ne.s32.totalorder %s70, %s86
      %p88 = scmp.eq.s32.totalorder %s22, 0
      %p89 = por %p87, %p88
      %s91 = sadd.s32 %s90, 1
      %p94 = scmp.eq.s32.totalorder %s16, 1
      %p95 = scmp.ne.s32.totalorder %s90, %s92
      %p96 = scmp.eq.s32.totalorder %s16, 0
      %p97 = por %p95, %p96
      %p98 = scmp.ne.s32.totalorder %s90, %s92
      %p99 = scmp.eq.s32.totalorder %s21, 1
      %p100 = por %p98, %p99
      %p101 = scmp.ne.s32.totalorder %s92, %s93
      %p102 = scmp.eq.s32.totalorder %s21, 0
      %p103 = por %p101, %p102
      %p104 = scmp.ne.s32.totalorder %s92, %s93
      %p105 = scmp.eq.s32.totalorder %s22, 1
      %p106 = por %p104, %p105
      %p108 = scmp.ne.s32.totalorder %s93, %s107
      %p109 = scmp.eq.s32.totalorder %s22, 0
      %p110 = por %p108, %p109
      %s112 = sadd.s32 %s111, 1
      %p115 = scmp.eq.s32.totalorder %s16, 1
      %p116 = scmp.ne.s32.totalorder %s111, %s113
      %p117 = scmp.eq.s32.totalorder %s16, 0
      %p118 = por %p116, %p117
      %p119 = scmp.ne.s32.totalorder %s111, %s113
      %p120 = scmp.eq.s32.totalorder %s21, 1
      %p121 = por %p119, %p120
      %p122 = scmp.ne.s32.totalorder %s113, %s114
      %p123 = scmp.eq.s32.totalorder %s21, 0
      %p124 = por %p122, %p123
      %p125 = scmp.ne.s32.totalorder %s113, %s114
      %p126 = scmp.eq.s32.totalorder %s22, 1
      %p127 = por %p125, %p126
      %p129 = scmp.ne.s32.totalorder %s114, %s128
      %p130 = scmp.eq.s32.totalorder %s22, 0
      %p131 = por %p129, %p130
      %s133 = sadd.s32 %s132, 1
      %p136 = scmp.eq.s32.totalorder %s16, 1
      %p137 = scmp.ne.s32.totalorder %s132, %s134
      %p138 = scmp.eq.s32.totalorder %s16, 0
      %p139 = por %p137, %p138
      %p140 = scmp.ne.s32.totalorder %s132, %s134
      %p141 = scmp.eq.s32.totalorder %s21, 1
      %p142 = por %p140, %p141
      %p143 = scmp.ne.s32.totalorder %s134, %s135
      %p144 = scmp.eq.s32.totalorder %s21, 0
      %p145 = por %p143, %p144
      %p146 = scmp.ne.s32.totalorder %s134, %s135
      %p147 = scmp.eq.s32.totalorder %s22, 1
      %p148 = por %p146, %p147
      %p150 = scmp.ne.s32.totalorder %s135, %s149
      %p151 = scmp.eq.s32.totalorder %s22, 0
      %p152 = por %p150, %p151
      %s153 = ssub.s32 %s23, %s35
      %p154 = scmp.eq.s32.totalorder %s153, 0
      %s156 = sadd.s32 %s155, 1
      %s157 = scalar_select %p154, %s155, %s156
      %p160 = pneg %p154
      %p161 = scmp.eq.s32.totalorder %s16, 1
      %p162 = por %p160, %p161
      %p163 = scmp.ne.s32.totalorder %s155, %s158
      %p164 = scmp.eq.s32.totalorder %s16, 0
      %p165 = por %p163, %p164
      %p166 = scmp.ne.s32.totalorder %s155, %s158
      %p167 = scmp.eq.s32.totalorder %s21, 1
      %p168 = por %p166, %p167
      %p169 = scmp.ne.s32.totalorder %s158, %s159
      %p170 = scmp.eq.s32.totalorder %s21, 0
      %p171 = por %p169, %p170
      %p172 = scmp.ne.s32.totalorder %s158, %s159
      %p173 = scmp.eq.s32.totalorder %s22, 1
      %p174 = por %p172, %p173
      %p176 = scmp.ne.s32.totalorder %s159, %s175
      %p177 = scmp.eq.s32.totalorder %s22, 0
      %p178 = por %p176, %p177
      %p179 = scmp.le.s32.totalorder 1, %s16
      %p180 = scmp.lt.s32.totalorder %s16, 3
      %p181 = pnand %p179, %p180
      %p182 = pneg %p181
      // Predicated region
      $region9: #{tpu_custom_call.1} parent=5 // pred_check
        _
      $region10: #{tpu_custom_call.1} parent=5 // pred_check_branch
        %184 = sbr.rel (%p181) target = $region12
      $region11: #{tpu_custom_call.1} parent=5 // pred_region
        %s185 = ssub.s32 %s16, 1
        // Predicated region
        $region13: #{tpu_custom_call.1} parent=11 // pred_check
          %p186 = pneg %p54
        $region14: #{tpu_custom_call.1} parent=11 // pred_check_branch
          %188 = sbr.rel (%p186) target = $region16
        $region15: #{tpu_custom_call.1} parent=11 // pred_region
          %p189 = scmp.lt.s32.totalorder %s25, 0
          %s190 = scalar_select %p189, %s25, 0
          %s191 = smul.addr %s190, 8
          %s192 = scalar_lea.vmem %s0, %s191
        $region16: #{tpu_custom_call.1} parent=11 // pred_fallthru
          _
        // Predicated region
        $region17: #{tpu_custom_call.1} parent=11 // pred_check
          %p193 = pneg %p103
        $region18: #{tpu_custom_call.1} parent=11 // pred_check_branch
          %195 = sbr.rel (%p193) target = $region20
        $region19: #{tpu_custom_call.1} parent=11 // pred_region
          %197 = vsyncadd [#allocation7], 0
          %s198 = sshll.u32 %s2, 4
          %s199 = int_to_ptr.hbm [resolvable:$true] %s198
          %s200 = sshll.u32 [#allocation6], 4
          %s201 = int_to_ptr.vmem [resolvable:$true] %s200
          %206 = dma.hbm_to_vmem [thread:$0]  %s199, 8192, %s201, [#allocation7], 512, 512, 32
        $region20: #{tpu_custom_call.1} parent=11 // pred_fallthru
          _
        // Predicated region
        $region21: #{tpu_custom_call.1} parent=11 // pred_check
          %p207 = pneg %p124
        $region22: #{tpu_custom_call.1} parent=11 // pred_check_branch
          %209 = sbr.rel (%p207) target = $region24
        $region23: #{tpu_custom_call.1} parent=11 // pred_region
          %211 = vsyncadd [#allocation7], 0
          %s212 = sshll.u32 %s3, 4
          %s213 = int_to_ptr.hbm [resolvable:$true] %s212
          %s214 = sshll.u32 [#allocation8], 4
          %s215 = int_to_ptr.vmem [resolvable:$true] %s214
          %220 = dma.hbm_to_vmem [thread:$0]  %s213, 8192, %s215, [#allocation7], 512, 512, 32
        $region24: #{tpu_custom_call.1} parent=11 // pred_fallthru
          _
        // Predicated region
        $region25: #{tpu_custom_call.1} parent=11 // pred_check
          %p221 = pneg %p145
        $region26: #{tpu_custom_call.1} parent=11 // pred_check_branch
          %223 = sbr.rel (%p221) target = $region28
        $region27: #{tpu_custom_call.1} parent=11 // pred_region
          _
        $region28: #{tpu_custom_call.1} parent=11 // pred_fallthru
          _
      $region12: #{tpu_custom_call.1} parent=5 // pred_fallthru
        _
      %p224 = scmp.lt.s32.totalorder %s16, 2
      // Predicated region
      $region29: #{tpu_custom_call.1} parent=5 // pred_check
        %p225 = pneg %p224
      $region30: #{tpu_custom_call.1} parent=5 // pred_check_branch
        %227 = sbr.rel (%p225) target = $region32
      $region31: #{tpu_custom_call.1} parent=5 // pred_region
        // Predicated region
        $region33: #{tpu_custom_call.1} parent=31 // pred_check
          %p228 = pneg %p76
        $region34: #{tpu_custom_call.1} parent=31 // pred_check_branch
          %230 = sbr.rel (%p228) target = $region36
        $region35: #{tpu_custom_call.1} parent=31 // pred_region
          %s231 = sand.u32 %s66, 1
          %s232 = scalar_lea.sflag [#allocation4], %s231
          %s233 = sand.u32 %s66, 1
          %s234 = smul.addr %s233, 32
          %s235 = scalar_lea.vmem [#allocation3], %s234
          %s236 = smul.u32 4, %s24
          %238 = vsyncadd %s232, 0
          %s239 = sadd.s32 %s23, %s236
          %s240 = smul.addr %s239, 8
          %s241 = scalar_lea.hbm %s1, %s240
          %s242 = sshll.u32 %s241, 4
          %s243 = int_to_ptr.hbm [resolvable:$true] %s242
          %s244 = sshll.u32 %s235, 4
          %s245 = int_to_ptr.vmem [resolvable:$true] %s244
          %250 = dma.hbm_to_vmem [thread:$0]  %s243, 512, %s245, %s232, 128, 128, 8
        $region36: #{tpu_custom_call.1} parent=31 // pred_fallthru
          _
      $region32: #{tpu_custom_call.1} parent=5 // pred_fallthru
        _
      %p251 = scmp.le.s32.totalorder 1, %s16
      %p252 = scmp.lt.s32.totalorder %s16, 3
      %p253 = pnand %p251, %p252
      %p254 = pneg %p253
      // Predicated region
      $region37: #{tpu_custom_call.1} parent=5 // pred_check
        _
      $region38: #{tpu_custom_call.1} parent=5 // pred_check_branch
        %256 = sbr.rel (%p253) target = $region40
      $region39: #{tpu_custom_call.1} parent=5 // pred_region
        %s257 = ssub.s32 %s16, 1
        %s258 = sand.u32 %s69, 1
        %s259 = scalar_lea.sflag [#allocation4], %s258
        %s260 = sand.u32 %s69, 1
        %s261 = smul.addr %s260, 32
        %s262 = scalar_lea.vmem [#allocation3], %s261
        // Predicated region
        $region41: #{tpu_custom_call.1} parent=39 // pred_check
          %p263 = pneg %p82
        $region42: #{tpu_custom_call.1} parent=39 // pred_check_branch
          %265 = sbr.rel (%p263) target = $region44
        $region43: #{tpu_custom_call.1} parent=39 // pred_region
          %267 = dma.done %s259, 512
        $region44: #{tpu_custom_call.1} parent=39 // pred_fallthru
          _
        // Predicated region
        $region45: #{tpu_custom_call.1} parent=39 // pred_check
          %p268 = pneg %p103
        $region46: #{tpu_custom_call.1} parent=39 // pred_check_branch
          %270 = sbr.rel (%p268) target = $region48
        $region47: #{tpu_custom_call.1} parent=39 // pred_region
          %272 = dma.done [#allocation7], 8192
        $region48: #{tpu_custom_call.1} parent=39 // pred_fallthru
          _
        // Predicated region
        $region49: #{tpu_custom_call.1} parent=39 // pred_check
          %p273 = pneg %p124
        $region50: #{tpu_custom_call.1} parent=39 // pred_check_branch
          %275 = sbr.rel (%p273) target = $region52
        $region51: #{tpu_custom_call.1} parent=39 // pred_region
          %277 = dma.done [#allocation7], 8192
        $region52: #{tpu_custom_call.1} parent=39 // pred_fallthru
          _
        %p278 = scmp.lt.s32.totalorder %s25, 0
        %s279 = scalar_select %p278, %s25, 0
        %s280 = smul.addr %s279, 8
        %s281 = scalar_lea.vmem %s0, %s280
        %p282 = pneg %p54
        %p283 = pneg %p51
        %s284 = sand.u32 %s69, 1
        %s285 = scalar_lea.sflag [#allocation4], %s284
        %s286 = sand.u32 %s69, 1
        %s287 = smul.addr %s286, 32
        %s288 = scalar_lea.vmem [#allocation3], %s287
        %p289 = pneg %p82
        %p290 = pneg %p79
        %p291 = pneg %p103
        %p292 = pneg %p100
        %p293 = pneg %p124
        %p294 = pneg %p121
        %p295 = pneg %p145
        %p296 = pneg %p142
        %p297 = pneg %p171
        %p298 = pneg %p168
        %p299 = scmp.lt.s32.totalorder %s25, 0
        %s300 = scalar_select %p299, %s25, 0
        %s301 = smul.addr %s300, 8
        %s302 = scalar_lea.vmem %s0, %s301
        %s303 = smul.u32 4, %s26
        %p304 = scmp.eq.s32.totalorder %s26, 0
        // Predicated region
        $region53: #{tpu_custom_call.1} parent=39 // pred_check
          %p305 = pneg %p304
        $region54: #{tpu_custom_call.1} parent=39 // pred_check_branch
          %307 = sbr.rel (%p305) target = $region56
        $region55: #{tpu_custom_call.1} parent=39 // pred_region
          %308 = vst [vmem:[#allocation9] sm:$0xff] 0.0
          %309 = vst [vmem:[#allocation2] sm:$0xff] 0.0
        $region56: #{tpu_custom_call.1} parent=39 // pred_fallthru
          _
        %v310 = vld [vmem:[%s302] sm:$0xff]
        %v311 = vld [vmem:[#allocation6] sm:$0xff]
        %v312 = vld [vmem:[#allocation6 + $0x8] sm:$0xff]
        %v313 = vld [vmem:[#allocation6 + $0x10] sm:$0xff]
        %v314 = vld [vmem:[#allocation6 + $0x18] sm:$0xff]
        %v315 = vld [vmem:[#allocation6 + $0x20] sm:$0xff]
        %v316 = vld [vmem:[#allocation6 + $0x28] sm:$0xff]
        %v317 = vld [vmem:[#allocation6 + $0x30] sm:$0xff]
        %v318 = vld [vmem:[#allocation6 + $0x38] sm:$0xff]
        %v319 = vld [vmem:[#allocation6 + $0x40] sm:$0xff]
        %v320 = vld [vmem:[#allocation6 + $0x48] sm:$0xff]
        %v321 = vld [vmem:[#allocation6 + $0x50] sm:$0xff]
        %v322 = vld [vmem:[#allocation6 + $0x58] sm:$0xff]
        %v323 = vld [vmem:[#allocation6 + $0x60] sm:$0xff]
        %v324 = vld [vmem:[#allocation6 + $0x68] sm:$0xff]
        %v325 = vld [vmem:[#allocation6 + $0x70] sm:$0xff]
        %v326 = vld [vmem:[#allocation6 + $0x78] sm:$0xff]
        %v327 = vld [vmem:[#allocation6 + $0x80] sm:$0xff]
        %v328 = vld [vmem:[#allocation6 + $0x88] sm:$0xff]
        %v329 = vld [vmem:[#allocation6 + $0x90] sm:$0xff]
        %v330 = vld [vmem:[#allocation6 + $0x98] sm:$0xff]
        %v331 = vld [vmem:[#allocation6 + $0xa0] sm:$0xff]
        %v332 = vld [vmem:[#allocation6 + $0xa8] sm:$0xff]
        %v333 = vld [vmem:[#allocation6 + $0xb0] sm:$0xff]
        %v334 = vld [vmem:[#allocation6 + $0xb8] sm:$0xff]
        %v335 = vld [vmem:[#allocation6 + $0xc0] sm:$0xff]
        %v336 = vld [vmem:[#allocation6 + $0xc8] sm:$0xff]
        %v337 = vld [vmem:[#allocation6 + $0xd0] sm:$0xff]
        %v338 = vld [vmem:[#allocation6 + $0xd8] sm:$0xff]
        %v339 = vld [vmem:[#allocation6 + $0xe0] sm:$0xff]
        %v340 = vld [vmem:[#allocation6 + $0xe8] sm:$0xff]
        %v341 = vld [vmem:[#allocation6 + $0xf0] sm:$0xff]
        %v342 = vld [vmem:[#allocation6 + $0xf8] sm:$0xff]
        %v343 = vld [vmem:[#allocation6 + $0x100] sm:$0xff]
        %v344 = vld [vmem:[#allocation6 + $0x108] sm:$0xff]
        %v345 = vld [vmem:[#allocation6 + $0x110] sm:$0xff]
        %v346 = vld [vmem:[#allocation6 + $0x118] sm:$0xff]
        %v347 = vld [vmem:[#allocation6 + $0x120] sm:$0xff]
        %v348 = vld [vmem:[#allocation6 + $0x128] sm:$0xff]
        %v349 = vld [vmem:[#allocation6 + $0x130] sm:$0xff]
        %v350 = vld [vmem:[#allocation6 + $0x138] sm:$0xff]
        %v351 = vld [vmem:[#allocation6 + $0x140] sm:$0xff]
        %v352 = vld [vmem:[#allocation6 + $0x148] sm:$0xff]
        %v353 = vld [vmem:[#allocation6 + $0x150] sm:$0xff]
        %v354 = vld [vmem:[#allocation6 + $0x158] sm:$0xff]
        %v355 = vld [vmem:[#allocation6 + $0x160] sm:$0xff]
        %v356 = vld [vmem:[#allocation6 + $0x168] sm:$0xff]
        %v357 = vld [vmem:[#allocation6 + $0x170] sm:$0xff]
        %v358 = vld [vmem:[#allocation6 + $0x178] sm:$0xff]
        %v359 = vld [vmem:[#allocation6 + $0x180] sm:$0xff]
        %v360 = vld [vmem:[#allocation6 + $0x188] sm:$0xff]
        %v361 = vld [vmem:[#allocation6 + $0x190] sm:$0xff]
        %v362 = vld [vmem:[#allocation6 + $0x198] sm:$0xff]
        %v363 = vld [vmem:[#allocation6 + $0x1a0] sm:$0xff]
        %v364 = vld [vmem:[#allocation6 + $0x1a8] sm:$0xff]
        %v365 = vld [vmem:[#allocation6 + $0x1b0] sm:$0xff]
        %v366 = vld [vmem:[#allocation6 + $0x1b8] sm:$0xff]
        %v367 = vld [vmem:[#allocation6 + $0x1c0] sm:$0xff]
        %v368 = vld [vmem:[#allocation6 + $0x1c8] sm:$0xff]
        %v369 = vld [vmem:[#allocation6 + $0x1d0] sm:$0xff]
        %v370 = vld [vmem:[#allocation6 + $0x1d8] sm:$0xff]
        %v371 = vld [vmem:[#allocation6 + $0x1e0] sm:$0xff]
        %v372 = vld [vmem:[#allocation6 + $0x1e8] sm:$0xff]
        %v373 = vld [vmem:[#allocation6 + $0x1f0] sm:$0xff]
        %v374 = vld [vmem:[#allocation6 + $0x1f8] sm:$0xff]
        %v375 = vld [vmem:[#allocation8] sm:$0xff]
        %v376 = vld [vmem:[#allocation8 + $0x8] sm:$0xff]
        %v377 = vld [vmem:[#allocation8 + $0x10] sm:$0xff]
        %v378 = vld [vmem:[#allocation8 + $0x18] sm:$0xff]
        %v379 = vld [vmem:[#allocation8 + $0x20] sm:$0xff]
        %v380 = vld [vmem:[#allocation8 + $0x28] sm:$0xff]
        %v381 = vld [vmem:[#allocation8 + $0x30] sm:$0xff]
        %v382 = vld [vmem:[#allocation8 + $0x38] sm:$0xff]
        %v383 = vld [vmem:[#allocation8 + $0x40] sm:$0xff]
        %v384 = vld [vmem:[#allocation8 + $0x48] sm:$0xff]
        %v385 = vld [vmem:[#allocation8 + $0x50] sm:$0xff]
        %v386 = vld [vmem:[#allocation8 + $0x58] sm:$0xff]
        %v387 = vld [vmem:[#allocation8 + $0x60] sm:$0xff]
        %v388 = vld [vmem:[#allocation8 + $0x68] sm:$0xff]
        %v389 = vld [vmem:[#allocation8 + $0x70] sm:$0xff]
        %v390 = vld [vmem:[#allocation8 + $0x78] sm:$0xff]
        %v391 = vld [vmem:[#allocation8 + $0x80] sm:$0xff]
        %v392 = vld [vmem:[#allocation8 + $0x88] sm:$0xff]
        %v393 = vld [vmem:[#allocation8 + $0x90] sm:$0xff]
        %v394 = vld [vmem:[#allocation8 + $0x98] sm:$0xff]
        %v395 = vld [vmem:[#allocation8 + $0xa0] sm:$0xff]
        %v396 = vld [vmem:[#allocation8 + $0xa8] sm:$0xff]
        %v397 = vld [vmem:[#allocation8 + $0xb0] sm:$0xff]
        %v398 = vld [vmem:[#allocation8 + $0xb8] sm:$0xff]
        %v399 = vld [vmem:[#allocation8 + $0xc0] sm:$0xff]
        %v400 = vld [vmem:[#allocation8 + $0xc8] sm:$0xff]
        %v401 = vld [vmem:[#allocation8 + $0xd0] sm:$0xff]
        %v402 = vld [vmem:[#allocation8 + $0xd8] sm:$0xff]
        %v403 = vld [vmem:[#allocation8 + $0xe0] sm:$0xff]
        %v404 = vld [vmem:[#allocation8 + $0xe8] sm:$0xff]
        %v405 = vld [vmem:[#allocation8 + $0xf0] sm:$0xff]
        %v406 = vld [vmem:[#allocation8 + $0xf8] sm:$0xff]
        %v407 = vld [vmem:[#allocation8 + $0x100] sm:$0xff]
        %v408 = vld [vmem:[#allocation8 + $0x108] sm:$0xff]
        %v409 = vld [vmem:[#allocation8 + $0x110] sm:$0xff]
        %v410 = vld [vmem:[#allocation8 + $0x118] sm:$0xff]
        %v411 = vld [vmem:[#allocation8 + $0x120] sm:$0xff]
        %v412 = vld [vmem:[#allocation8 + $0x128] sm:$0xff]
        %v413 = vld [vmem:[#allocation8 + $0x130] sm:$0xff]
        %v414 = vld [vmem:[#allocation8 + $0x138] sm:$0xff]
        %v415 = vld [vmem:[#allocation8 + $0x140] sm:$0xff]
        %v416 = vld [vmem:[#allocation8 + $0x148] sm:$0xff]
        %v417 = vld [vmem:[#allocation8 + $0x150] sm:$0xff]
        %v418 = vld [vmem:[#allocation8 + $0x158] sm:$0xff]
        %v419 = vld [vmem:[#allocation8 + $0x160] sm:$0xff]
        %v420 = vld [vmem:[#allocation8 + $0x168] sm:$0xff]
        %v421 = vld [vmem:[#allocation8 + $0x170] sm:$0xff]
        %v422 = vld [vmem:[#allocation8 + $0x178] sm:$0xff]
        %v423 = vld [vmem:[#allocation8 + $0x180] sm:$0xff]
        %v424 = vld [vmem:[#allocation8 + $0x188] sm:$0xff]
        %v425 = vld [vmem:[#allocation8 + $0x190] sm:$0xff]
        %v426 = vld [vmem:[#allocation8 + $0x198] sm:$0xff]
        %v427 = vld [vmem:[#allocation8 + $0x1a0] sm:$0xff]
        %v428 = vld [vmem:[#allocation8 + $0x1a8] sm:$0xff]
        %v429 = vld [vmem:[#allocation8 + $0x1b0] sm:$0xff]
        %v430 = vld [vmem:[#allocation8 + $0x1b8] sm:$0xff]
        %v431 = vld [vmem:[#allocation8 + $0x1c0] sm:$0xff]
        %v432 = vld [vmem:[#allocation8 + $0x1c8] sm:$0xff]
        %v433 = vld [vmem:[#allocation8 + $0x1d0] sm:$0xff]
        %v434 = vld [vmem:[#allocation8 + $0x1d8] sm:$0xff]
        %v435 = vld [vmem:[#allocation8 + $0x1e0] sm:$0xff]
        %v436 = vld [vmem:[#allocation8 + $0x1e8] sm:$0xff]
        %v437 = vld [vmem:[#allocation8 + $0x1f0] sm:$0xff]
        %v438 = vld [vmem:[#allocation8 + $0x1f8] sm:$0xff]
        %v439 = vld [vmem:[%s4] sm:$0xf]
        %s440 = smul.u32 %s26, 4
        %v441 = vld [vmem:[#allocation9] sm:$0xff]
        %v442 = vld [vmem:[#allocation2] sm:$0xff]
        %v443 = vld [vmem:[%s262] sm:$0xff]
        %444 = vmatpush.msra.mxu0 %v435
        %445 = vmatpush.msra.mxu0 %v431
        %446 = vmatpush.msra.mxu0 %v427
        %447 = vmatpush.msra.mxu0 %v423
        %448 = vmatpush.msra.mxu0 %v419
        %449 = vmatpush.msra.mxu0 %v415
        %450 = vmatpush.msra.mxu0 %v411
        %451 = vmatpush.msra.mxu0 %v407
        %452 = vmatpush.msra.mxu0 %v403
        %453 = vmatpush.msra.mxu0 %v399
        %454 = vmatpush.msra.mxu0 %v395
        %455 = vmatpush.msra.mxu0 %v391
        %456 = vmatpush.msra.mxu0 %v387
        %457 = vmatpush.msra.mxu0 %v383
        %458 = vmatpush.msra.mxu0 %v379
        %459 = vmatpush.msra.mxu0 %v375
        %460 = vmatmul.f32.gmra.mxu0 %v441
        %v461 = vpop.f32.mrf.mxu0
        %v462 = vadd.f32 0.0, %v461
        %463 = vdwg.mxu0
        %464 = vmatpush.msra.mxu0 %v436
        %465 = vmatpush.msra.mxu0 %v432
        %466 = vmatpush.msra.mxu0 %v428
        %467 = vmatpush.msra.mxu0 %v424
        %468 = vmatpush.msra.mxu0 %v420
        %469 = vmatpush.msra.mxu0 %v416
        %470 = vmatpush.msra.mxu0 %v412
        %471 = vmatpush.msra.mxu0 %v408
        %472 = vmatpush.msra.mxu0 %v404
        %473 = vmatpush.msra.mxu0 %v400
        %474 = vmatpush.msra.mxu0 %v396
        %475 = vmatpush.msra.mxu0 %v392
        %476 = vmatpush.msra.mxu0 %v388
        %477 = vmatpush.msra.mxu0 %v384
        %478 = vmatpush.msra.mxu0 %v380
        %479 = vmatpush.msra.mxu0 %v376
        %480 = vmatmul.f32.gmra.mxu0 %v441
        %v481 = vpop.f32.mrf.mxu0
        %v482 = vadd.f32 0.0, %v481
        %483 = vdwg.mxu0
        %484 = vmatpush.msra.mxu0 %v437
        %485 = vmatpush.msra.mxu0 %v433
        %486 = vmatpush.msra.mxu0 %v429
        %487 = vmatpush.msra.mxu0 %v425
        %488 = vmatpush.msra.mxu0 %v421
        %489 = vmatpush.msra.mxu0 %v417
        %490 = vmatpush.msra.mxu0 %v413
        %491 = vmatpush.msra.mxu0 %v409
        %492 = vmatpush.msra.mxu0 %v405
        %493 = vmatpush.msra.mxu0 %v401
        %494 = vmatpush.msra.mxu0 %v397
        %495 = vmatpush.msra.mxu0 %v393
        %496 = vmatpush.msra.mxu0 %v389
        %497 = vmatpush.msra.mxu0 %v385
        %498 = vmatpush.msra.mxu0 %v381
        %499 = vmatpush.msra.mxu0 %v377
        %500 = vmatmul.f32.gmra.mxu0 %v441
        %v501 = vpop.f32.mrf.mxu0
        %v502 = vadd.f32 0.0, %v501
        %503 = vdwg.mxu0
        %504 = vmatpush.msra.mxu0 %v438
        %505 = vmatpush.msra.mxu0 %v434
        %506 = vmatpush.msra.mxu0 %v430
        %507 = vmatpush.msra.mxu0 %v426
        %508 = vmatpush.msra.mxu0 %v422
        %509 = vmatpush.msra.mxu0 %v418
        %510 = vmatpush.msra.mxu0 %v414
        %511 = vmatpush.msra.mxu0 %v410
        %512 = vmatpush.msra.mxu0 %v406
        %513 = vmatpush.msra.mxu0 %v402
        %514 = vmatpush.msra.mxu0 %v398
        %515 = vmatpush.msra.mxu0 %v394
        %516 = vmatpush.msra.mxu0 %v390
        %517 = vmatpush.msra.mxu0 %v386
        %518 = vmatpush.msra.mxu0 %v382
        %519 = vmatpush.msra.mxu0 %v378
        %520 = vmatmul.f32.gmra.mxu0 %v441
        %v521 = vpop.f32.mrf.mxu0
        %v522 = vadd.f32 0.0, %v521
        %523 = vdwg.mxu0
        %524 = vmatpush.msra.mxu0 %v371
        %525 = vmatpush.msra.mxu0 %v367
        %526 = vmatpush.msra.mxu0 %v363
        %527 = vmatpush.msra.mxu0 %v359
        %528 = vmatpush.msra.mxu0 %v355
        %529 = vmatpush.msra.mxu0 %v351
        %530 = vmatpush.msra.mxu0 %v347
        %531 = vmatpush.msra.mxu0 %v343
        %532 = vmatpush.msra.mxu0 %v339
        %533 = vmatpush.msra.mxu0 %v335
        %534 = vmatpush.msra.mxu0 %v331
        %535 = vmatpush.msra.mxu0 %v327
        %536 = vmatpush.msra.mxu0 %v323
        %537 = vmatpush.msra.mxu0 %v319
        %538 = vmatpush.msra.mxu0 %v315
        %539 = vmatpush.msra.mxu0 %v311
        %540 = vmatmul.f32.gmra.mxu0 %v443
        %v541 = vpop.f32.mrf.mxu0
        %v542 = vadd.f32 %v462, %v541
        %543 = vdwg.mxu0
        %544 = vmatpush.msra.mxu0 %v372
        %545 = vmatpush.msra.mxu0 %v368
        %546 = vmatpush.msra.mxu0 %v364
        %547 = vmatpush.msra.mxu0 %v360
        %548 = vmatpush.msra.mxu0 %v356
        %549 = vmatpush.msra.mxu0 %v352
        %550 = vmatpush.msra.mxu0 %v348
        %551 = vmatpush.msra.mxu0 %v344
        %552 = vmatpush.msra.mxu0 %v340
        %553 = vmatpush.msra.mxu0 %v336
        %554 = vmatpush.msra.mxu0 %v332
        %555 = vmatpush.msra.mxu0 %v328
        %556 = vmatpush.msra.mxu0 %v324
        %557 = vmatpush.msra.mxu0 %v320
        %558 = vmatpush.msra.mxu0 %v316
        %559 = vmatpush.msra.mxu0 %v312
        %560 = vmatmul.f32.gmra.mxu0 %v443
        %v561 = vpop.f32.mrf.mxu0
        %v562 = vadd.f32 %v482, %v561
        %563 = vdwg.mxu0
        %564 = vmatpush.msra.mxu0 %v373
        %565 = vmatpush.msra.mxu0 %v369
        %566 = vmatpush.msra.mxu0 %v365
        %567 = vmatpush.msra.mxu0 %v361
        %568 = vmatpush.msra.mxu0 %v357
        %569 = vmatpush.msra.mxu0 %v353
        %570 = vmatpush.msra.mxu0 %v349
        %571 = vmatpush.msra.mxu0 %v345
        %572 = vmatpush.msra.mxu0 %v341
        %573 = vmatpush.msra.mxu0 %v337
        %574 = vmatpush.msra.mxu0 %v333
        %575 = vmatpush.msra.mxu0 %v329
        %576 = vmatpush.msra.mxu0 %v325
        %577 = vmatpush.msra.mxu0 %v321
        %578 = vmatpush.msra.mxu0 %v317
        %579 = vmatpush.msra.mxu0 %v313
        %580 = vmatmul.f32.gmra.mxu0 %v443
        %v581 = vpop.f32.mrf.mxu0
        %v582 = vadd.f32 %v502, %v581
        %583 = vdwg.mxu0
        %584 = vmatpush.msra.mxu0 %v374
        %585 = vmatpush.msra.mxu0 %v370
        %586 = vmatpush.msra.mxu0 %v366
        %587 = vmatpush.msra.mxu0 %v362
        %588 = vmatpush.msra.mxu0 %v358
        %589 = vmatpush.msra.mxu0 %v354
        %590 = vmatpush.msra.mxu0 %v350
        %591 = vmatpush.msra.mxu0 %v346
        %592 = vmatpush.msra.mxu0 %v342
        %593 = vmatpush.msra.mxu0 %v338
        %594 = vmatpush.msra.mxu0 %v334
        %595 = vmatpush.msra.mxu0 %v330
        %596 = vmatpush.msra.mxu0 %v326
        %597 = vmatpush.msra.mxu0 %v322
        %598 = vmatpush.msra.mxu0 %v318
        %599 = vmatpush.msra.mxu0 %v314
        %600 = vmatmul.f32.gmra.mxu0 %v443
        %v601 = vpop.f32.mrf.mxu0
        %v602 = vadd.f32 %v522, %v601
        %603 = vdwg.mxu0
        %v605 = vperm.slane %v439, 0
        %v606 = vperm.slane %v439, 1
        %v607 = vperm.slane %v439, 2
        %v608 = vperm.slane %v439, 3
        %v613 = vadd.f32 %v542, %v605
        %v614 = vadd.f32 %v562, %v606
        %v615 = vadd.f32 %v582, %v607
        %v616 = vadd.f32 %v602, %v608
        %v617 = vxor.u32 %v613, 2147483648
        %v618 = vmul.f32 %v617, 1.442695
        %v619 = vpow.pop %v618
        %v620 = vadd.f32 %v619, 1.0
        %v621 = vrcp.pop %v620
        %v622 = vmul.f32 %v620, %v621
        %v623 = vsub.f32 1.0, %v622
        %v624 = vmul.f32 %v621, %v623
        %v625 = vadd.f32 %v621, %v624
        %vm626 = vweird.f32 %v620
        %vm627 = vweird.f32 %v621
        %vm628 = vmor %vm626, %vm627
        %v629 = vsel %vm628, %v621, %v625
        %v630 = vand.u32 2147483647, %v620
        %vm631 = vcmp.eq.f32.partialorder %v630, 8.507059e+37
        %v632 = vand.u32 %v620, 2147483648
        %v633 = vor.u32 1.1754944e-38, %v632
        %v634 = vsel %vm631, %v633, %v629
        %v635 = vmul.f32 1.0, %v634
        %v636 = vxor.u32 %v614, 2147483648
        %v637 = vmul.f32 %v636, 1.442695
        %v638 = vpow.pop %v637
        %v639 = vadd.f32 %v638, 1.0
        %v640 = vrcp.pop %v639
        %v641 = vmul.f32 %v639, %v640
        %v642 = vsub.f32 1.0, %v641
        %v643 = vmul.f32 %v640, %v642
        %v644 = vadd.f32 %v640, %v643
        %vm645 = vweird.f32 %v639
        %vm646 = vweird.f32 %v640
        %vm647 = vmor %vm645, %vm646
        %v648 = vsel %vm647, %v640, %v644
        %v649 = vand.u32 2147483647, %v639
        %vm650 = vcmp.eq.f32.partialorder %v649, 8.507059e+37
        %v651 = vand.u32 %v639, 2147483648
        %v652 = vor.u32 1.1754944e-38, %v651
        %v653 = vsel %vm650, %v652, %v648
        %v654 = vmul.f32 1.0, %v653
        %v655 = vtanh.pop %v615
        %v656 = vxor.u32 %v616, 2147483648
        %v657 = vmul.f32 %v656, 1.442695
        %v658 = vpow.pop %v657
        %v659 = vadd.f32 %v658, 1.0
        %v660 = vrcp.pop %v659
        %v661 = vmul.f32 %v659, %v660
        %v662 = vsub.f32 1.0, %v661
        %v663 = vmul.f32 %v660, %v662
        %v664 = vadd.f32 %v660, %v663
        %vm665 = vweird.f32 %v659
        %vm666 = vweird.f32 %v660
        %vm667 = vmor %vm665, %vm666
        %v668 = vsel %vm667, %v660, %v664
        %v669 = vand.u32 2147483647, %v659
        %vm670 = vcmp.eq.f32.partialorder %v669, 8.507059e+37
        %v671 = vand.u32 %v659, 2147483648
        %v672 = vor.u32 1.1754944e-38, %v671
        %v673 = vsel %vm670, %v672, %v668
        %v674 = vmul.f32 1.0, %v673
        %v675 = vmul.f32 %v654, %v442
        %v676 = vmul.f32 %v635, %v655
        %v677 = vadd.f32 %v675, %v676
        %v678 = vtanh.pop %v677
        %v679 = vmul.f32 %v674, %v678
        %v680 = vstv %s440
        %vm681 = vcmp.lt.s32.totalorder %v680, %v310
        %v682 = vsel %vm681, 1, 0
        %683 = vset.pattern.permute.xlu0 0
        %684 = vperm.xlu0 %683, %v682
        %v685 = vpop.permute.xlu0 %684
        %vm686 = vcmp.eq.s32.totalorder %v685, 1
        %v687 = vsel %vm686, %v679, %v441
        %v688 = vsel %vm686, %v677, %v442
        %s689 = scalar_lea.vmem %s262, 8 [#allocation3]
        %v690 = vld [vmem:[%s689] sm:$0xff]
        %691 = vmatpush.msra.mxu0 %v435
        %692 = vmatpush.msra.mxu0 %v431
        %693 = vmatpush.msra.mxu0 %v427
        %694 = vmatpush.msra.mxu0 %v423
        %695 = vmatpush.msra.mxu0 %v419
        %696 = vmatpush.msra.mxu0 %v415
        %697 = vmatpush.msra.mxu0 %v411
        %698 = vmatpush.msra.mxu0 %v407
        %699 = vmatpush.msra.mxu0 %v403
        %700 = vmatpush.msra.mxu0 %v399
        %701 = vmatpush.msra.mxu0 %v395
        %702 = vmatpush.msra.mxu0 %v391
        %703 = vmatpush.msra.mxu0 %v387
        %704 = vmatpush.msra.mxu0 %v383
        %705 = vmatpush.msra.mxu0 %v379
        %706 = vmatpush.msra.mxu0 %v375
        %707 = vmatmul.f32.gmra.mxu0 %v687
        %v708 = vpop.f32.mrf.mxu0
        %v709 = vadd.f32 0.0, %v708
        %710 = vdwg.mxu0
        %711 = vmatpush.msra.mxu0 %v436
        %712 = vmatpush.msra.mxu0 %v432
        %713 = vmatpush.msra.mxu0 %v428
        %714 = vmatpush.msra.mxu0 %v424
        %715 = vmatpush.msra.mxu0 %v420
        %716 = vmatpush.msra.mxu0 %v416
        %717 = vmatpush.msra.mxu0 %v412
        %718 = vmatpush.msra.mxu0 %v408
        %719 = vmatpush.msra.mxu0 %v404
        %720 = vmatpush.msra.mxu0 %v400
        %721 = vmatpush.msra.mxu0 %v396
        %722 = vmatpush.msra.mxu0 %v392
        %723 = vmatpush.msra.mxu0 %v388
        %724 = vmatpush.msra.mxu0 %v384
        %725 = vmatpush.msra.mxu0 %v380
        %726 = vmatpush.msra.mxu0 %v376
        %727 = vmatmul.f32.gmra.mxu0 %v687
        %v728 = vpop.f32.mrf.mxu0
        %v729 = vadd.f32 0.0, %v728
        %730 = vdwg.mxu0
        %731 = vmatpush.msra.mxu0 %v437
        %732 = vmatpush.msra.mxu0 %v433
        %733 = vmatpush.msra.mxu0 %v429
        %734 = vmatpush.msra.mxu0 %v425
        %735 = vmatpush.msra.mxu0 %v421
        %736 = vmatpush.msra.mxu0 %v417
        %737 = vmatpush.msra.mxu0 %v413
        %738 = vmatpush.msra.mxu0 %v409
        %739 = vmatpush.msra.mxu0 %v405
        %740 = vmatpush.msra.mxu0 %v401
        %741 = vmatpush.msra.mxu0 %v397
        %742 = vmatpush.msra.mxu0 %v393
        %743 = vmatpush.msra.mxu0 %v389
        %744 = vmatpush.msra.mxu0 %v385
        %745 = vmatpush.msra.mxu0 %v381
        %746 = vmatpush.msra.mxu0 %v377
        %747 = vmatmul.f32.gmra.mxu0 %v687
        %v748 = vpop.f32.mrf.mxu0
        %v749 = vadd.f32 0.0, %v748
        %750 = vdwg.mxu0
        %751 = vmatpush.msra.mxu0 %v438
        %752 = vmatpush.msra.mxu0 %v434
        %753 = vmatpush.msra.mxu0 %v430
        %754 = vmatpush.msra.mxu0 %v426
        %755 = vmatpush.msra.mxu0 %v422
        %756 = vmatpush.msra.mxu0 %v418
        %757 = vmatpush.msra.mxu0 %v414
        %758 = vmatpush.msra.mxu0 %v410
        %759 = vmatpush.msra.mxu0 %v406
        %760 = vmatpush.msra.mxu0 %v402
        %761 = vmatpush.msra.mxu0 %v398
        %762 = vmatpush.msra.mxu0 %v394
        %763 = vmatpush.msra.mxu0 %v390
        %764 = vmatpush.msra.mxu0 %v386
        %765 = vmatpush.msra.mxu0 %v382
        %766 = vmatpush.msra.mxu0 %v378
        %767 = vmatmul.f32.gmra.mxu0 %v687
        %v768 = vpop.f32.mrf.mxu0
        %v769 = vadd.f32 0.0, %v768
        %770 = vdwg.mxu0
        %771 = vmatpush.msra.mxu0 %v371
        %772 = vmatpush.msra.mxu0 %v367
        %773 = vmatpush.msra.mxu0 %v363
        %774 = vmatpush.msra.mxu0 %v359
        %775 = vmatpush.msra.mxu0 %v355
        %776 = vmatpush.msra.mxu0 %v351
        %777 = vmatpush.msra.mxu0 %v347
        %778 = vmatpush.msra.mxu0 %v343
        %779 = vmatpush.msra.mxu0 %v339
        %780 = vmatpush.msra.mxu0 %v335
        %781 = vmatpush.msra.mxu0 %v331
        %782 = vmatpush.msra.mxu0 %v327
        %783 = vmatpush.msra.mxu0 %v323
        %784 = vmatpush.msra.mxu0 %v319
        %785 = vmatpush.msra.mxu0 %v315
        %786 = vmatpush.msra.mxu0 %v311
        %787 = vmatmul.f32.gmra.mxu0 %v690
        %v788 = vpop.f32.mrf.mxu0
        %v789 = vadd.f32 %v709, %v788
        %790 = vdwg.mxu0
        %791 = vmatpush.msra.mxu0 %v372
        %792 = vmatpush.msra.mxu0 %v368
        %793 = vmatpush.msra.mxu0 %v364
        %794 = vmatpush.msra.mxu0 %v360
        %795 = vmatpush.msra.mxu0 %v356
        %796 = vmatpush.msra.mxu0 %v352
        %797 = vmatpush.msra.mxu0 %v348
        %798 = vmatpush.msra.mxu0 %v344
        %799 = vmatpush.msra.mxu0 %v340
        %800 = vmatpush.msra.mxu0 %v336
        %801 = vmatpush.msra.mxu0 %v332
        %802 = vmatpush.msra.mxu0 %v328
        %803 = vmatpush.msra.mxu0 %v324
        %804 = vmatpush.msra.mxu0 %v320
        %805 = vmatpush.msra.mxu0 %v316
        %806 = vmatpush.msra.mxu0 %v312
        %807 = vmatmul.f32.gmra.mxu0 %v690
        %v808 = vpop.f32.mrf.mxu0
        %v809 = vadd.f32 %v729, %v808
        %810 = vdwg.mxu0
        %811 = vmatpush.msra.mxu0 %v373
        %812 = vmatpush.msra.mxu0 %v369
        %813 = vmatpush.msra.mxu0 %v365
        %814 = vmatpush.msra.mxu0 %v361
        %815 = vmatpush.msra.mxu0 %v357
        %816 = vmatpush.msra.mxu0 %v353
        %817 = vmatpush.msra.mxu0 %v349
        %818 = vmatpush.msra.mxu0 %v345
        %819 = vmatpush.msra.mxu0 %v341
        %820 = vmatpush.msra.mxu0 %v337
        %821 = vmatpush.msra.mxu0 %v333
        %822 = vmatpush.msra.mxu0 %v329
        %823 = vmatpush.msra.mxu0 %v325
        %824 = vmatpush.msra.mxu0 %v321
        %825 = vmatpush.msra.mxu0 %v317
        %826 = vmatpush.msra.mxu0 %v313
        %827 = vmatmul.f32.gmra.mxu0 %v690
        %v828 = vpop.f32.mrf.mxu0
        %v829 = vadd.f32 %v749, %v828
        %830 = vdwg.mxu0
        %831 = vmatpush.msra.mxu0 %v374
        %832 = vmatpush.msra.mxu0 %v370
        %833 = vmatpush.msra.mxu0 %v366
        %834 = vmatpush.msra.mxu0 %v362
        %835 = vmatpush.msra.mxu0 %v358
        %836 = vmatpush.msra.mxu0 %v354
        %837 = vmatpush.msra.mxu0 %v350
        %838 = vmatpush.msra.mxu0 %v346
        %839 = vmatpush.msra.mxu0 %v342
        %840 = vmatpush.msra.mxu0 %v338
        %841 = vmatpush.msra.mxu0 %v334
        %842 = vmatpush.msra.mxu0 %v330
        %843 = vmatpush.msra.mxu0 %v326
        %844 = vmatpush.msra.mxu0 %v322
        %845 = vmatpush.msra.mxu0 %v318
        %846 = vmatpush.msra.mxu0 %v314
        %847 = vmatmul.f32.gmra.mxu0 %v690
        %v848 = vpop.f32.mrf.mxu0
        %v849 = vadd.f32 %v769, %v848
        %850 = vdwg.mxu0
        %v851 = vadd.f32 %v789, %v605
        %v852 = vadd.f32 %v809, %v606
        %v853 = vadd.f32 %v829, %v607
        %v854 = vadd.f32 %v849, %v608
        %v855 = vxor.u32 %v851, 2147483648
        %v856 = vmul.f32 %v855, 1.442695
        %v857 = vpow.pop %v856
        %v858 = vadd.f32 %v857, 1.0
        %v859 = vrcp.pop %v858
        %v860 = vmul.f32 %v858, %v859
        %v861 = vsub.f32 1.0, %v860
        %v862 = vmul.f32 %v859, %v861
        %v863 = vadd.f32 %v859, %v862
        %vm864 = vweird.f32 %v858
        %vm865 = vweird.f32 %v859
        %vm866 = vmor %vm864, %vm865
        %v867 = vsel %vm866, %v859, %v863
        %v868 = vand.u32 2147483647, %v858
        %vm869 = vcmp.eq.f32.partialorder %v868, 8.507059e+37
        %v870 = vand.u32 %v858, 2147483648
        %v871 = vor.u32 1.1754944e-38, %v870
        %v872 = vsel %vm869, %v871, %v867
        %v873 = vmul.f32 1.0, %v872
        %v874 = vxor.u32 %v852, 2147483648
        %v875 = vmul.f32 %v874, 1.442695
        %v876 = vpow.pop %v875
        %v877 = vadd.f32 %v876, 1.0
        %v878 = vrcp.pop %v877
        %v879 = vmul.f32 %v877, %v878
        %v880 = vsub.f32 1.0, %v879
        %v881 = vmul.f32 %v878, %v880
        %v882 = vadd.f32 %v878, %v881
        %vm883 = vweird.f32 %v877
        %vm884 = vweird.f32 %v878
        %vm885 = vmor %vm883, %vm884
        %v886 = vsel %vm885, %v878, %v882
        %v887 = vand.u32 2147483647, %v877
        %vm888 = vcmp.eq.f32.partialorder %v887, 8.507059e+37
        %v889 = vand.u32 %v877, 2147483648
        %v890 = vor.u32 1.1754944e-38, %v889
        %v891 = vsel %vm888, %v890, %v886
        %v892 = vmul.f32 1.0, %v891
        %v893 = vtanh.pop %v853
        %v894 = vxor.u32 %v854, 2147483648
        %v895 = vmul.f32 %v894, 1.442695
        %v896 = vpow.pop %v895
        %v897 = vadd.f32 %v896, 1.0
        %v898 = vrcp.pop %v897
        %v899 = vmul.f32 %v897, %v898
        %v900 = vsub.f32 1.0, %v899
        %v901 = vmul.f32 %v898, %v900
        %v902 = vadd.f32 %v898, %v901
        %vm903 = vweird.f32 %v897
        %vm904 = vweird.f32 %v898
        %vm905 = vmor %vm903, %vm904
        %v906 = vsel %vm905, %v898, %v902
        %v907 = vand.u32 2147483647, %v897
        %vm908 = vcmp.eq.f32.partialorder %v907, 8.507059e+37
        %v909 = vand.u32 %v897, 2147483648
        %v910 = vor.u32 1.1754944e-38, %v909
        %v911 = vsel %vm908, %v910, %v906
        %v912 = vmul.f32 1.0, %v911
        %v913 = vmul.f32 %v892, %v688
        %v914 = vmul.f32 %v873, %v893
        %v915 = vadd.f32 %v913, %v914
        %v916 = vtanh.pop %v915
        %v917 = vmul.f32 %v912, %v916
        %s918 = sadd.s32 %s440, 1
        %v919 = vstv %s918
        %vm920 = vcmp.lt.s32.totalorder %v919, %v310
        %v921 = vsel %vm920, 1, 0
        %922 = vset.pattern.permute.xlu0 0
        %923 = vperm.xlu0 %922, %v921
        %v924 = vpop.permute.xlu0 %923
        %vm925 = vcmp.eq.s32.totalorder %v924, 1
        %v926 = vsel %vm925, %v917, %v687
        %v927 = vsel %vm925, %v915, %v688
        %s928 = scalar_lea.vmem %s262, 16 [#allocation3]
        %v929 = vld [vmem:[%s928] sm:$0xff]
        %930 = vmatpush.msra.mxu0 %v435
        %931 = vmatpush.msra.mxu0 %v431
        %932 = vmatpush.msra.mxu0 %v427
        %933 = vmatpush.msra.mxu0 %v423
        %934 = vmatpush.msra.mxu0 %v419
        %935 = vmatpush.msra.mxu0 %v415
        %936 = vmatpush.msra.mxu0 %v411
        %937 = vmatpush.msra.mxu0 %v407
        %938 = vmatpush.msra.mxu0 %v403
        %939 = vmatpush.msra.mxu0 %v399
        %940 = vmatpush.msra.mxu0 %v395
        %941 = vmatpush.msra.mxu0 %v391
        %942 = vmatpush.msra.mxu0 %v387
        %943 = vmatpush.msra.mxu0 %v383
        %944 = vmatpush.msra.mxu0 %v379
        %945 = vmatpush.msra.mxu0 %v375
        %946 = vmatmul.f32.gmra.mxu0 %v926
        %v947 = vpop.f32.mrf.mxu0
        %v948 = vadd.f32 0.0, %v947
        %949 = vdwg.mxu0
        %950 = vmatpush.msra.mxu0 %v436
        %951 = vmatpush.msra.mxu0 %v432
        %952 = vmatpush.msra.mxu0 %v428
        %953 = vmatpush.msra.mxu0 %v424
        %954 = vmatpush.msra.mxu0 %v420
        %955 = vmatpush.msra.mxu0 %v416
        %956 = vmatpush.msra.mxu0 %v412
        %957 = vmatpush.msra.mxu0 %v408
        %958 = vmatpush.msra.mxu0 %v404
        %959 = vmatpush.msra.mxu0 %v400
        %960 = vmatpush.msra.mxu0 %v396
        %961 = vmatpush.msra.mxu0 %v392
        %962 = vmatpush.msra.mxu0 %v388
        %963 = vmatpush.msra.mxu0 %v384
        %964 = vmatpush.msra.mxu0 %v380
        %965 = vmatpush.msra.mxu0 %v376
        %966 = vmatmul.f32.gmra.mxu0 %v926
        %v967 = vpop.f32.mrf.mxu0
        %v968 = vadd.f32 0.0, %v967
        %969 = vdwg.mxu0
        %970 = vmatpush.msra.mxu0 %v437
        %971 = vmatpush.msra.mxu0 %v433
        %972 = vmatpush.msra.mxu0 %v429
        %973 = vmatpush.msra.mxu0 %v425
        %974 = vmatpush.msra.mxu0 %v421
        %975 = vmatpush.msra.mxu0 %v417
        %976 = vmatpush.msra.mxu0 %v413
        %977 = vmatpush.msra.mxu0 %v409
        %978 = vmatpush.msra.mxu0 %v405
        %979 = vmatpush.msra.mxu0 %v401
        %980 = vmatpush.msra.mxu0 %v397
        %981 = vmatpush.msra.mxu0 %v393
        %982 = vmatpush.msra.mxu0 %v389
        %983 = vmatpush.msra.mxu0 %v385
        %984 = vmatpush.msra.mxu0 %v381
        %985 = vmatpush.msra.mxu0 %v377
        %986 = vmatmul.f32.gmra.mxu0 %v926
        %v987 = vpop.f32.mrf.mxu0
        %v988 = vadd.f32 0.0, %v987
        %989 = vdwg.mxu0
        %990 = vmatpush.msra.mxu0 %v438
        %991 = vmatpush.msra.mxu0 %v434
        %992 = vmatpush.msra.mxu0 %v430
        %993 = vmatpush.msra.mxu0 %v426
        %994 = vmatpush.msra.mxu0 %v422
        %995 = vmatpush.msra.mxu0 %v418
        %996 = vmatpush.msra.mxu0 %v414
        %997 = vmatpush.msra.mxu0 %v410
        %998 = vmatpush.msra.mxu0 %v406
        %999 = vmatpush.msra.mxu0 %v402
        %1000 = vmatpush.msra.mxu0 %v398
        %1001 = vmatpush.msra.mxu0 %v394
        %1002 = vmatpush.msra.mxu0 %v390
        %1003 = vmatpush.msra.mxu0 %v386
        %1004 = vmatpush.msra.mxu0 %v382
        %1005 = vmatpush.msra.mxu0 %v378
        %1006 = vmatmul.f32.gmra.mxu0 %v926
        %v1007 = vpop.f32.mrf.mxu0
        %v1008 = vadd.f32 0.0, %v1007
        %1009 = vdwg.mxu0
        %1010 = vmatpush.msra.mxu0 %v371
        %1011 = vmatpush.msra.mxu0 %v367
        %1012 = vmatpush.msra.mxu0 %v363
        %1013 = vmatpush.msra.mxu0 %v359
        %1014 = vmatpush.msra.mxu0 %v355
        %1015 = vmatpush.msra.mxu0 %v351
        %1016 = vmatpush.msra.mxu0 %v347
        %1017 = vmatpush.msra.mxu0 %v343
        %1018 = vmatpush.msra.mxu0 %v339
        %1019 = vmatpush.msra.mxu0 %v335
        %1020 = vmatpush.msra.mxu0 %v331
        %1021 = vmatpush.msra.mxu0 %v327
        %1022 = vmatpush.msra.mxu0 %v323
        %1023 = vmatpush.msra.mxu0 %v319
        %1024 = vmatpush.msra.mxu0 %v315
        %1025 = vmatpush.msra.mxu0 %v311
        %1026 = vmatmul.f32.gmra.mxu0 %v929
        %v1027 = vpop.f32.mrf.mxu0
        %v1028 = vadd.f32 %v948, %v1027
        %1029 = vdwg.mxu0
        %1030 = vmatpush.msra.mxu0 %v372
        %1031 = vmatpush.msra.mxu0 %v368
        %1032 = vmatpush.msra.mxu0 %v364
        %1033 = vmatpush.msra.mxu0 %v360
        %1034 = vmatpush.msra.mxu0 %v356
        %1035 = vmatpush.msra.mxu0 %v352
        %1036 = vmatpush.msra.mxu0 %v348
        %1037 = vmatpush.msra.mxu0 %v344
        %1038 = vmatpush.msra.mxu0 %v340
        %1039 = vmatpush.msra.mxu0 %v336
        %1040 = vmatpush.msra.mxu0 %v332
        %1041 = vmatpush.msra.mxu0 %v328
        %1042 = vmatpush.msra.mxu0 %v324
        %1043 = vmatpush.msra.mxu0 %v320
        %1044 = vmatpush.msra.mxu0 %v316
        %1045 = vmatpush.msra.mxu0 %v312
        %1046 = vmatmul.f32.gmra.mxu0 %v929
        %v1047 = vpop.f32.mrf.mxu0
        %v1048 = vadd.f32 %v968, %v1047
        %1049 = vdwg.mxu0
        %1050 = vmatpush.msra.mxu0 %v373
        %1051 = vmatpush.msra.mxu0 %v369
        %1052 = vmatpush.msra.mxu0 %v365
        %1053 = vmatpush.msra.mxu0 %v361
        %1054 = vmatpush.msra.mxu0 %v357
        %1055 = vmatpush.msra.mxu0 %v353
        %1056 = vmatpush.msra.mxu0 %v349
        %1057 = vmatpush.msra.mxu0 %v345
        %1058 = vmatpush.msra.mxu0 %v341
        %1059 = vmatpush.msra.mxu0 %v337
        %1060 = vmatpush.msra.mxu0 %v333
        %1061 = vmatpush.msra.mxu0 %v329
        %1062 = vmatpush.msra.mxu0 %v325
        %1063 = vmatpush.msra.mxu0 %v321
        %1064 = vmatpush.msra.mxu0 %v317
        %1065 = vmatpush.msra.mxu0 %v313
        %1066 = vmatmul.f32.gmra.mxu0 %v929
        %v1067 = vpop.f32.mrf.mxu0
        %v1068 = vadd.f32 %v988, %v1067
        %1069 = vdwg.mxu0
        %1070 = vmatpush.msra.mxu0 %v374
        %1071 = vmatpush.msra.mxu0 %v370
        %1072 = vmatpush.msra.mxu0 %v366
        %1073 = vmatpush.msra.mxu0 %v362
        %1074 = vmatpush.msra.mxu0 %v358
        %1075 = vmatpush.msra.mxu0 %v354
        %1076 = vmatpush.msra.mxu0 %v350
        %1077 = vmatpush.msra.mxu0 %v346
        %1078 = vmatpush.msra.mxu0 %v342
        %1079 = vmatpush.msra.mxu0 %v338
        %1080 = vmatpush.msra.mxu0 %v334
        %1081 = vmatpush.msra.mxu0 %v330
        %1082 = vmatpush.msra.mxu0 %v326
        %1083 = vmatpush.msra.mxu0 %v322
        %1084 = vmatpush.msra.mxu0 %v318
        %1085 = vmatpush.msra.mxu0 %v314
        %1086 = vmatmul.f32.gmra.mxu0 %v929
        %v1087 = vpop.f32.mrf.mxu0
        %v1088 = vadd.f32 %v1008, %v1087
        %1089 = vdwg.mxu0
        %v1090 = vadd.f32 %v1028, %v605
        %v1091 = vadd.f32 %v1048, %v606
        %v1092 = vadd.f32 %v1068, %v607
        %v1093 = vadd.f32 %v1088, %v608
        %v1094 = vxor.u32 %v1090, 2147483648
        %v1095 = vmul.f32 %v1094, 1.442695
        %v1096 = vpow.pop %v1095
        %v1097 = vadd.f32 %v1096, 1.0
        %v1098 = vrcp.pop %v1097
        %v1099 = vmul.f32 %v1097, %v1098
        %v1100 = vsub.f32 1.0, %v1099
        %v1101 = vmul.f32 %v1098, %v1100
        %v1102 = vadd.f32 %v1098, %v1101
        %vm1103 = vweird.f32 %v1097
        %vm1104 = vweird.f32 %v1098
        %vm1105 = vmor %vm1103, %vm1104
        %v1106 = vsel %vm1105, %v1098, %v1102
        %v1107 = vand.u32 2147483647, %v1097
        %vm1108 = vcmp.eq.f32.partialorder %v1107, 8.507059e+37
        %v1109 = vand.u32 %v1097, 2147483648
        %v1110 = vor.u32 1.1754944e-38, %v1109
        %v1111 = vsel %vm1108, %v1110, %v1106
        %v1112 = vmul.f32 1.0, %v1111
        %v1113 = vxor.u32 %v1091, 2147483648
        %v1114 = vmul.f32 %v1113, 1.442695
        %v1115 = vpow.pop %v1114
        %v1116 = vadd.f32 %v1115, 1.0
        %v1117 = vrcp.pop %v1116
        %v1118 = vmul.f32 %v1116, %v1117
        %v1119 = vsub.f32 1.0, %v1118
        %v1120 = vmul.f32 %v1117, %v1119
        %v1121 = vadd.f32 %v1117, %v1120
        %vm1122 = vweird.f32 %v1116
        %vm1123 = vweird.f32 %v1117
        %vm1124 = vmor %vm1122, %vm1123
        %v1125 = vsel %vm1124, %v1117, %v1121
        %v1126 = vand.u32 2147483647, %v1116
        %vm1127 = vcmp.eq.f32.partialorder %v1126, 8.507059e+37
        %v1128 = vand.u32 %v1116, 2147483648
        %v1129 = vor.u32 1.1754944e-38, %v1128
        %v1130 = vsel %vm1127, %v1129, %v1125
        %v1131 = vmul.f32 1.0, %v1130
        %v1132 = vtanh.pop %v1092
        %v1133 = vxor.u32 %v1093, 2147483648
        %v1134 = vmul.f32 %v1133, 1.442695
        %v1135 = vpow.pop %v1134
        %v1136 = vadd.f32 %v1135, 1.0
        %v1137 = vrcp.pop %v1136
        %v1138 = vmul.f32 %v1136, %v1137
        %v1139 = vsub.f32 1.0, %v1138
        %v1140 = vmul.f32 %v1137, %v1139
        %v1141 = vadd.f32 %v1137, %v1140
        %vm1142 = vweird.f32 %v1136
        %vm1143 = vweird.f32 %v1137
        %vm1144 = vmor %vm1142, %vm1143
        %v1145 = vsel %vm1144, %v1137, %v1141
        %v1146 = vand.u32 2147483647, %v1136
        %vm1147 = vcmp.eq.f32.partialorder %v1146, 8.507059e+37
        %v1148 = vand.u32 %v1136, 2147483648
        %v1149 = vor.u32 1.1754944e-38, %v1148
        %v1150 = vsel %vm1147, %v1149, %v1145
        %v1151 = vmul.f32 1.0, %v1150
        %v1152 = vmul.f32 %v1131, %v927
        %v1153 = vmul.f32 %v1112, %v1132
        %v1154 = vadd.f32 %v1152, %v1153
        %v1155 = vtanh.pop %v1154
        %v1156 = vmul.f32 %v1151, %v1155
        %s1157 = sadd.s32 %s440, 2
        %v1158 = vstv %s1157
        %vm1159 = vcmp.lt.s32.totalorder %v1158, %v310
        %v1160 = vsel %vm1159, 1, 0
        %1161 = vset.pattern.permute.xlu0 0
        %1162 = vperm.xlu0 %1161, %v1160
        %v1163 = vpop.permute.xlu0 %1162
        %vm1164 = vcmp.eq.s32.totalorder %v1163, 1
        %v1165 = vsel %vm1164, %v1156, %v926
        %v1166 = vsel %vm1164, %v1154, %v927
        %s1167 = scalar_lea.vmem %s262, 24 [#allocation3]
        %v1168 = vld [vmem:[%s1167] sm:$0xff]
        %1169 = vmatpush.msra.mxu0 %v435
        %1170 = vmatpush.msra.mxu0 %v431
        %1171 = vmatpush.msra.mxu0 %v427
        %1172 = vmatpush.msra.mxu0 %v423
        %1173 = vmatpush.msra.mxu0 %v419
        %1174 = vmatpush.msra.mxu0 %v415
        %1175 = vmatpush.msra.mxu0 %v411
        %1176 = vmatpush.msra.mxu0 %v407
        %1177 = vmatpush.msra.mxu0 %v403
        %1178 = vmatpush.msra.mxu0 %v399
        %1179 = vmatpush.msra.mxu0 %v395
        %1180 = vmatpush.msra.mxu0 %v391
        %1181 = vmatpush.msra.mxu0 %v387
        %1182 = vmatpush.msra.mxu0 %v383
        %1183 = vmatpush.msra.mxu0 %v379
        %1184 = vmatpush.msra.mxu0 %v375
        %1185 = vmatmul.f32.gmra.mxu0 %v1165
        %v1186 = vpop.f32.mrf.mxu0
        %v1187 = vadd.f32 0.0, %v1186
        %1188 = vdwg.mxu0
        %1189 = vmatpush.msra.mxu0 %v436
        %1190 = vmatpush.msra.mxu0 %v432
        %1191 = vmatpush.msra.mxu0 %v428
        %1192 = vmatpush.msra.mxu0 %v424
        %1193 = vmatpush.msra.mxu0 %v420
        %1194 = vmatpush.msra.mxu0 %v416
        %1195 = vmatpush.msra.mxu0 %v412
        %1196 = vmatpush.msra.mxu0 %v408
        %1197 = vmatpush.msra.mxu0 %v404
        %1198 = vmatpush.msra.mxu0 %v400
        %1199 = vmatpush.msra.mxu0 %v396
        %1200 = vmatpush.msra.mxu0 %v392
        %1201 = vmatpush.msra.mxu0 %v388
        %1202 = vmatpush.msra.mxu0 %v384
        %1203 = vmatpush.msra.mxu0 %v380
        %1204 = vmatpush.msra.mxu0 %v376
        %1205 = vmatmul.f32.gmra.mxu0 %v1165
        %v1206 = vpop.f32.mrf.mxu0
        %v1207 = vadd.f32 0.0, %v1206
        %1208 = vdwg.mxu0
        %1209 = vmatpush.msra.mxu0 %v437
        %1210 = vmatpush.msra.mxu0 %v433
        %1211 = vmatpush.msra.mxu0 %v429
        %1212 = vmatpush.msra.mxu0 %v425
        %1213 = vmatpush.msra.mxu0 %v421
        %1214 = vmatpush.msra.mxu0 %v417
        %1215 = vmatpush.msra.mxu0 %v413
        %1216 = vmatpush.msra.mxu0 %v409
        %1217 = vmatpush.msra.mxu0 %v405
        %1218 = vmatpush.msra.mxu0 %v401
        %1219 = vmatpush.msra.mxu0 %v397
        %1220 = vmatpush.msra.mxu0 %v393
        %1221 = vmatpush.msra.mxu0 %v389
        %1222 = vmatpush.msra.mxu0 %v385
        %1223 = vmatpush.msra.mxu0 %v381
        %1224 = vmatpush.msra.mxu0 %v377
        %1225 = vmatmul.f32.gmra.mxu0 %v1165
        %v1226 = vpop.f32.mrf.mxu0
        %v1227 = vadd.f32 0.0, %v1226
        %1228 = vdwg.mxu0
        %1229 = vmatpush.msra.mxu0 %v438
        %1230 = vmatpush.msra.mxu0 %v434
        %1231 = vmatpush.msra.mxu0 %v430
        %1232 = vmatpush.msra.mxu0 %v426
        %1233 = vmatpush.msra.mxu0 %v422
        %1234 = vmatpush.msra.mxu0 %v418
        %1235 = vmatpush.msra.mxu0 %v414
        %1236 = vmatpush.msra.mxu0 %v410
        %1237 = vmatpush.msra.mxu0 %v406
        %1238 = vmatpush.msra.mxu0 %v402
        %1239 = vmatpush.msra.mxu0 %v398
        %1240 = vmatpush.msra.mxu0 %v394
        %1241 = vmatpush.msra.mxu0 %v390
        %1242 = vmatpush.msra.mxu0 %v386
        %1243 = vmatpush.msra.mxu0 %v382
        %1244 = vmatpush.msra.mxu0 %v378
        %1245 = vmatmul.f32.gmra.mxu0 %v1165
        %v1246 = vpop.f32.mrf.mxu0
        %v1247 = vadd.f32 0.0, %v1246
        %1248 = vdwg.mxu0
        %1249 = vmatpush.msra.mxu0 %v371
        %1250 = vmatpush.msra.mxu0 %v367
        %1251 = vmatpush.msra.mxu0 %v363
        %1252 = vmatpush.msra.mxu0 %v359
        %1253 = vmatpush.msra.mxu0 %v355
        %1254 = vmatpush.msra.mxu0 %v351
        %1255 = vmatpush.msra.mxu0 %v347
        %1256 = vmatpush.msra.mxu0 %v343
        %1257 = vmatpush.msra.mxu0 %v339
        %1258 = vmatpush.msra.mxu0 %v335
        %1259 = vmatpush.msra.mxu0 %v331
        %1260 = vmatpush.msra.mxu0 %v327
        %1261 = vmatpush.msra.mxu0 %v323
        %1262 = vmatpush.msra.mxu0 %v319
        %1263 = vmatpush.msra.mxu0 %v315
        %1264 = vmatpush.msra.mxu0 %v311
        %1265 = vmatmul.f32.gmra.mxu0 %v1168
        %v1266 = vpop.f32.mrf.mxu0
        %v1267 = vadd.f32 %v1187, %v1266
        %1268 = vdwg.mxu0
        %1269 = vmatpush.msra.mxu0 %v372
        %1270 = vmatpush.msra.mxu0 %v368
        %1271 = vmatpush.msra.mxu0 %v364
        %1272 = vmatpush.msra.mxu0 %v360
        %1273 = vmatpush.msra.mxu0 %v356
        %1274 = vmatpush.msra.mxu0 %v352
        %1275 = vmatpush.msra.mxu0 %v348
        %1276 = vmatpush.msra.mxu0 %v344
        %1277 = vmatpush.msra.mxu0 %v340
        %1278 = vmatpush.msra.mxu0 %v336
        %1279 = vmatpush.msra.mxu0 %v332
        %1280 = vmatpush.msra.mxu0 %v328
        %1281 = vmatpush.msra.mxu0 %v324
        %1282 = vmatpush.msra.mxu0 %v320
        %1283 = vmatpush.msra.mxu0 %v316
        %1284 = vmatpush.msra.mxu0 %v312
        %1285 = vmatmul.f32.gmra.mxu0 %v1168
        %v1286 = vpop.f32.mrf.mxu0
        %v1287 = vadd.f32 %v1207, %v1286
        %1288 = vdwg.mxu0
        %1289 = vmatpush.msra.mxu0 %v373
        %1290 = vmatpush.msra.mxu0 %v369
        %1291 = vmatpush.msra.mxu0 %v365
        %1292 = vmatpush.msra.mxu0 %v361
        %1293 = vmatpush.msra.mxu0 %v357
        %1294 = vmatpush.msra.mxu0 %v353
        %1295 = vmatpush.msra.mxu0 %v349
        %1296 = vmatpush.msra.mxu0 %v345
        %1297 = vmatpush.msra.mxu0 %v341
        %1298 = vmatpush.msra.mxu0 %v337
        %1299 = vmatpush.msra.mxu0 %v333
        %1300 = vmatpush.msra.mxu0 %v329
        %1301 = vmatpush.msra.mxu0 %v325
        %1302 = vmatpush.msra.mxu0 %v321
        %1303 = vmatpush.msra.mxu0 %v317
        %1304 = vmatpush.msra.mxu0 %v313
        %1305 = vmatmul.f32.gmra.mxu0 %v1168
        %v1306 = vpop.f32.mrf.mxu0
        %v1307 = vadd.f32 %v1227, %v1306
        %1308 = vdwg.mxu0
        %1309 = vmatpush.msra.mxu0 %v374
        %1310 = vmatpush.msra.mxu0 %v370
        %1311 = vmatpush.msra.mxu0 %v366
        %1312 = vmatpush.msra.mxu0 %v362
        %1313 = vmatpush.msra.mxu0 %v358
        %1314 = vmatpush.msra.mxu0 %v354
        %1315 = vmatpush.msra.mxu0 %v350
        %1316 = vmatpush.msra.mxu0 %v346
        %1317 = vmatpush.msra.mxu0 %v342
        %1318 = vmatpush.msra.mxu0 %v338
        %1319 = vmatpush.msra.mxu0 %v334
        %1320 = vmatpush.msra.mxu0 %v330
        %1321 = vmatpush.msra.mxu0 %v326
        %1322 = vmatpush.msra.mxu0 %v322
        %1323 = vmatpush.msra.mxu0 %v318
        %1324 = vmatpush.msra.mxu0 %v314
        %1325 = vmatmul.f32.gmra.mxu0 %v1168
        %v1326 = vpop.f32.mrf.mxu0
        %v1327 = vadd.f32 %v1247, %v1326
        %1328 = vdwg.mxu0
        %v1329 = vadd.f32 %v1267, %v605
        %v1330 = vadd.f32 %v1287, %v606
        %v1331 = vadd.f32 %v1307, %v607
        %v1332 = vadd.f32 %v1327, %v608
        %v1333 = vxor.u32 %v1329, 2147483648
        %v1334 = vmul.f32 %v1333, 1.442695
        %v1335 = vpow.pop %v1334
        %v1336 = vadd.f32 %v1335, 1.0
        %v1337 = vrcp.pop %v1336
        %v1338 = vmul.f32 %v1336, %v1337
        %v1339 = vsub.f32 1.0, %v1338
        %v1340 = vmul.f32 %v1337, %v1339
        %v1341 = vadd.f32 %v1337, %v1340
        %vm1342 = vweird.f32 %v1336
        %vm1343 = vweird.f32 %v1337
        %vm1344 = vmor %vm1342, %vm1343
        %v1345 = vsel %vm1344, %v1337, %v1341
        %v1346 = vand.u32 2147483647, %v1336
        %vm1347 = vcmp.eq.f32.partialorder %v1346, 8.507059e+37
        %v1348 = vand.u32 %v1336, 2147483648
        %v1349 = vor.u32 1.1754944e-38, %v1348
        %v1350 = vsel %vm1347, %v1349, %v1345
        %v1351 = vmul.f32 1.0, %v1350
        %v1352 = vxor.u32 %v1330, 2147483648
        %v1353 = vmul.f32 %v1352, 1.442695
        %v1354 = vpow.pop %v1353
        %v1355 = vadd.f32 %v1354, 1.0
        %v1356 = vrcp.pop %v1355
        %v1357 = vmul.f32 %v1355, %v1356
        %v1358 = vsub.f32 1.0, %v1357
        %v1359 = vmul.f32 %v1356, %v1358
        %v1360 = vadd.f32 %v1356, %v1359
        %vm1361 = vweird.f32 %v1355
        %vm1362 = vweird.f32 %v1356
        %vm1363 = vmor %vm1361, %vm1362
        %v1364 = vsel %vm1363, %v1356, %v1360
        %v1365 = vand.u32 2147483647, %v1355
        %vm1366 = vcmp.eq.f32.partialorder %v1365, 8.507059e+37
        %v1367 = vand.u32 %v1355, 2147483648
        %v1368 = vor.u32 1.1754944e-38, %v1367
        %v1369 = vsel %vm1366, %v1368, %v1364
        %v1370 = vmul.f32 1.0, %v1369
        %v1371 = vtanh.pop %v1331
        %v1372 = vxor.u32 %v1332, 2147483648
        %v1373 = vmul.f32 %v1372, 1.442695
        %v1374 = vpow.pop %v1373
        %v1375 = vadd.f32 %v1374, 1.0
        %v1376 = vrcp.pop %v1375
        %v1377 = vmul.f32 %v1375, %v1376
        %v1378 = vsub.f32 1.0, %v1377
        %v1379 = vmul.f32 %v1376, %v1378
        %v1380 = vadd.f32 %v1376, %v1379
        %vm1381 = vweird.f32 %v1375
        %vm1382 = vweird.f32 %v1376
        %vm1383 = vmor %vm1381, %vm1382
        %v1384 = vsel %vm1383, %v1376, %v1380
        %v1385 = vand.u32 2147483647, %v1375
        %vm1386 = vcmp.eq.f32.partialorder %v1385, 8.507059e+37
        %v1387 = vand.u32 %v1375, 2147483648
        %v1388 = vor.u32 1.1754944e-38, %v1387
        %v1389 = vsel %vm1386, %v1388, %v1384
        %v1390 = vmul.f32 1.0, %v1389
        %v1391 = vmul.f32 %v1370, %v1166
        %v1392 = vmul.f32 %v1351, %v1371
        %v1393 = vadd.f32 %v1391, %v1392
        %v1394 = vtanh.pop %v1393
        %v1395 = vmul.f32 %v1390, %v1394
        %s1396 = sadd.s32 %s440, 3
        %v1397 = vstv %s1396
        %vm1398 = vcmp.lt.s32.totalorder %v1397, %v310
        %v1399 = vsel %vm1398, 1, 0
        %1400 = vset.pattern.permute.xlu0 0
        %1401 = vperm.xlu0 %1400, %v1399
        %v1402 = vpop.permute.xlu0 %1401
        %vm1403 = vcmp.eq.s32.totalorder %v1402, 1
        %v1404 = vsel %vm1403, %v1395, %v1165
        %v1405 = vsel %vm1403, %v1393, %v1166
        %1406 = vst [vmem:[#allocation9] sm:$0xff] %v1404
        %1407 = vst [vmem:[#allocation2] sm:$0xff] %v1405
        // Predicated region
        $region57: #{tpu_custom_call.1} parent=39 // pred_check
          %p1408 = pneg %p168
        $region58: #{tpu_custom_call.1} parent=39 // pred_check_branch
          %1410 = sbr.rel (%p1408) target = $region60
        $region59: #{tpu_custom_call.1} parent=39 // pred_region
          %1412 = vsyncadd [#allocation5], 0
          %s1413 = smul.addr %s25, 8
          %s1414 = scalar_lea.hbm %s5, %s1413
          %s1416 = sshll.u32 [#allocation9], 4
          %s1417 = int_to_ptr.vmem [resolvable:$true] %s1416
          %s1418 = sshll.u32 %s1414, 4
          %s1419 = int_to_ptr.hbm [resolvable:$true] %s1418
          %1421 = dma.vmem_to_hbm [thread:$0]  %s1417, 128, %s1419, [#allocation5]
        $region60: #{tpu_custom_call.1} parent=39 // pred_fallthru
          _
        // Predicated region
        $region61: #{tpu_custom_call.1} parent=39 // pred_check
          %p1422 = pneg %p168
        $region62: #{tpu_custom_call.1} parent=39 // pred_check_branch
          %1424 = sbr.rel (%p1422) target = $region64
        $region63: #{tpu_custom_call.1} parent=39 // pred_region
          %1426 = dma.done [#allocation5], 128
        $region64: #{tpu_custom_call.1} parent=39 // pred_fallthru
          _
      $region40: #{tpu_custom_call.1} parent=5 // pred_fallthru
        _
      %p1427 = scmp.le.s32.totalorder 2, %s16
      // Predicated region
      $region65: #{tpu_custom_call.1} parent=5 // pred_check
        %p1428 = pneg %p1427
      $region66: #{tpu_custom_call.1} parent=5 // pred_check_branch
        %1430 = sbr.rel (%p1428) target = $region68
      $region67: #{tpu_custom_call.1} parent=5 // pred_region
        %s1431 = ssub.s32 %s16, 2
      $region68: #{tpu_custom_call.1} parent=5 // pred_fallthru
        _
    $region6: #{tpu_custom_call.1} parent=1 // loop_footer
      %s20 = sadd.s32 1, %s16
    $region7: #{tpu_custom_call.1} parent=1 // loop_footer_branch
      %15 = sbr.rel target = $region3
    $region8: #{tpu_custom_call.1} parent=1 // loop_exit
      _
    %1432 = vsyncpa [#allocation4], 1
    %s1433 = scalar_lea.sflag [#allocation4], 1
    %1434 = vsyncpa %s1433, 1
    %1435 = vsyncpa [#allocation7], 1
    %1436 = vsyncpa [#allocation5], 1
    %s1437 = scalar_lea.sflag [#allocation5], 1
    %1438 = vsyncpa %s1437, 1

</llo_original>
